<compile_context>
chip_gen: v5e
topology: v5e:2x2
jax: 0.10.0
libtpu: 0.0.40
codegen_flags: <defaults>
</compile_context>

<pallas_src>
import math

import jax
import jax.numpy as jnp
from jax.experimental import pallas as pl
from jax.experimental.pallas import tpu as pltpu

# ----- scaled-down bert-base config (synthetic, deterministic init) -----
VOCAB = 100      # tiny synthetic vocab
MAX_POS = 64     # max position embeddings
TYPE_VOCAB = 2
D = 32           # hidden size  (== classifier D_in)
NH = 2           # attention heads
HD = D // NH     # head dim
DFF = 128        # FFN intermediate (4 * D)
NLAYERS = 2      # encoder layers
CLS_H = 50       # classifier hidden (matches nn.Linear(D_in, 50))
NCLASS = 2       # num labels
OUT_PAD = 128    # lane-dense padded logits width (sliced back to NCLASS in wrapper)
EPS = 1e-12      # BERT LayerNorm eps


# ----------------------- in-kernel math helpers -----------------------
def _layernorm(x, g, b):
    mu = jnp.mean(x, axis=-1, keepdims=True)
    xc = x - mu
    var = jnp.mean(xc * xc, axis=-1, keepdims=True)
    return xc * jax.lax.rsqrt(var + EPS) * g + b


def _gelu(x):
    # TODO(synk): HF BERT uses exact erf-GELU; tanh approximation used here (EUP-friendly).
    c = math.sqrt(2.0 / math.pi)
    return 0.5 * x * (1.0 + jnp.tanh(c * (x + 0.044715 * x * x * x)))


# ----------------------- fused Pallas kernel -----------------------
def fused_bert_kernel(ids_ref, mask_ref, wemb_ref, pemb_ref, temb_ref, eg_ref, eb_ref,
                      wqkv_ref, bqkv_ref, wo_ref, bo_ref, g1_ref, be1_ref,
                      w1_ref, bf1_ref, w2_ref, bf2_ref, g2_ref, be2_ref,
                      cw1_ref, cb1_ref, cw2_ref, cb2_ref, out_ref):
    """Whole forward for one batch block:
       embedding lookup + LN -> NLAYERS encoder layers -> classifier head.
    All activations / weights stay in VMEM & vregs; only the padded logits hit HBM."""
    _, bb, seq = mask_ref.shape
    m = bb * seq                                     # flattened token count
    g = NH * bb                                      # folded (head, batch) groups

    # ---- fused embedding lookup: one-hot @ word_emb on the MXU (no XLA gather) ----
    ids = ids_ref[0]                                 # (m, 1) int32
    onehot = (ids == jax.lax.broadcasted_iota(jnp.int32, (m, VOCAB), 1)).astype(jnp.float32)
    emb = jnp.dot(onehot, wemb_ref[...], preferred_element_type=jnp.float32)   # (m, D)
    # TODO(synk): token_type_ids assumed all-zero (single-sequence classification).
    emb = (emb.reshape(bb, seq, D)
           + pemb_ref[0:seq, :][None, :, :]
           + temb_ref[0:1, :][None, :, :])
    x = _layernorm(emb.reshape(m, D), eg_ref[...], eb_ref[...])

    # ---- additive attention bias: built + broadcast ONCE, reused by every layer ----
    maskf = mask_ref[0].astype(jnp.float32)                                    # (bb, S)
    bias1 = jnp.broadcast_to(((1.0 - maskf) * -10000.0)[:, None, :], (bb, seq, seq))
    bias = jnp.tile(bias1, (NH, 1, 1))               # (NH*bb, S, S), group order (h, b)

    for l in range(NLAYERS):                         # static unroll; weights VMEM-resident
        # fused QKV: ONE (m, D) @ (D, 3D) matmul (1/sqrt(HD) pre-folded into the Q part)
        qkv = jnp.dot(x, wqkv_ref[l], preferred_element_type=jnp.float32) + bqkv_ref[l]

        def split_heads(base):
            # (m, 3D) column slab -> (NH*bb, S, HD): heads folded into the batch dim
            return jnp.concatenate(
                [qkv[:, base + h * HD: base + (h + 1) * HD].reshape(bb, seq, HD)
                 for h in range(NH)], axis=0)

        qh, kh, vh = split_heads(0), split_heads(D), split_heads(2 * D)

        # all heads & batches in ONE batched score matmul + ONE softmax
        s = jax.lax.dot_general(qh, kh, (((2,), (2,)), ((0,), (0,))),
                                preferred_element_type=jnp.float32) + bias     # (g, S, S)
        s = s - jnp.max(s, axis=-1, keepdims=True)
        e = jnp.exp(s)
        p = e * pl.reciprocal(jnp.sum(e, axis=-1, keepdims=True), approx=True)
        ctx = jax.lax.dot_general(p, vh, (((2,), (1,)), ((0,), (0,))),
                                  preferred_element_type=jnp.float32)          # (g, S, HD)

        # heads back onto the lane axis -> ONE (m, D) @ (D, D) output projection
        ctx4 = ctx.reshape(NH, bb, seq, HD)
        ctx_cat = jnp.concatenate([ctx4[h] for h in range(NH)], axis=-1).reshape(m, D)
        attn = jnp.dot(ctx_cat, wo_ref[l], preferred_element_type=jnp.float32) + bo_ref[l]

        h1 = _layernorm(x + attn, g1_ref[l], be1_ref[l])
        ff = jnp.dot(h1, w1_ref[l], preferred_element_type=jnp.float32) + bf1_ref[l]
        ff = _gelu(ff)
        ff = jnp.dot(ff, w2_ref[l], preferred_element_type=jnp.float32) + bf2_ref[l]
        x = _layernorm(h1 + ff, g2_ref[l], be2_ref[l])

    # classifier head: CLS rows -> Linear(50) -> ReLU -> Linear(2, lane-padded to 128)
    cls = x.reshape(bb, seq, D)[:, 0, :]                                        # (bb, D)
    hid = jnp.maximum(
        jnp.dot(cls, cw1_ref[...], preferred_element_type=jnp.float32) + cb1_ref[...], 0.0)
    logits = jnp.dot(hid, cw2_ref[...], preferred_element_type=jnp.float32) + cb2_ref[...]
    out_ref[...] = logits.reshape(1, bb, OUT_PAD)    # lane-dense (128-wide) store


# ----------------------- wrapper (single pallas_call) -----------------------
def _default_batch_block(batch):
    """Split the batch grid only on v7x (2 TensorCores/chip); single step elsewhere."""
    try:
        kind = jax.devices()[0].device_kind.lower()
    except Exception:
        kind = ""
    if ("v7" in kind or "tpu7" in kind) and batch >= 2 and batch % 2 == 0:
        return batch // 2
    return batch


def bert_classifier_forward(input_ids, attention_mask, params, batch_block=None):
    """Equivalent of BertClassifier.forward: BERT encoder -> CLS token -> MLP head."""
    B, S = input_ids.shape
    bb = _default_batch_block(B) if batch_block is None else batch_block
    assert B % bb == 0, "batch_block must divide batch size"
    nblk = B // bb
    tb = bb * S

    ids_r = input_ids.astype(jnp.int32).reshape(nblk, tb, 1)
    mask_r = attention_mask.astype(jnp.int32).reshape(nblk, bb, S)

    def rep(shape):
        # weight block replicated across the batch grid axis (constant block index ->
        # Pallas skips the re-fetch on revisit; everything stays VMEM-resident).
        nd = len(shape)
        return pl.BlockSpec(shape, lambda i, _nd=nd: (0,) * _nd)

    in_specs = [
        pl.BlockSpec((1, tb, 1), lambda i: (i, 0, 0)),       # input_ids
        pl.BlockSpec((1, bb, S), lambda i: (i, 0, 0)),       # attention_mask
        rep((VOCAB, D)), rep((MAX_POS, D)), rep((TYPE_VOCAB, D)),   # embedding tables
        rep((1, D)), rep((1, D)),                            # emb LN gamma / beta
        rep((NLAYERS, D, 3 * D)), rep((NLAYERS, 1, 3 * D)),  # fused wqkv, bqkv
        rep((NLAYERS, D, D)), rep((NLAYERS, 1, D)),          # wo, bo
        rep((NLAYERS, 1, D)), rep((NLAYERS, 1, D)),          # ln1 gamma / beta
        rep((NLAYERS, D, DFF)), rep((NLAYERS, 1, DFF)),      # ffn w1, b1
        rep((NLAYERS, DFF, D)), rep((NLAYERS, 1, D)),        # ffn w2, b2
        rep((NLAYERS, 1, D)), rep((NLAYERS, 1, D)),          # ln2 gamma / beta
        rep((D, CLS_H)), rep((1, CLS_H)),                    # classifier w1, b1
        rep((CLS_H, OUT_PAD)), rep((1, OUT_PAD)),            # classifier w2, b2 (padded)
    ]

    out = pl.pallas_call(
        fused_bert_kernel,
        out_shape=jax.ShapeDtypeStruct((nblk, bb, OUT_PAD), jnp.float32),
        grid=(nblk,),
        in_specs=in_specs,
        out_specs=pl.BlockSpec((1, bb, OUT_PAD), lambda i: (i, 0, 0)),
        compiler_params=pltpu.CompilerParams(dimension_semantics=("parallel",)),
    )(ids_r, mask_r, params['word_emb'], params['pos_emb'], params['type_emb'],
      params['emb_ln_g'], params['emb_ln_b'],
      params['wqkv'], params['bqkv'], params['wo'], params['bo'],
      params['ln1_g'], params['ln1_b'], params['w1'], params['b1'],
      params['w2'], params['b2'], params['ln2_g'], params['ln2_b'],
      params['cls_w1'], params['cls_b1'], params['cls_w2p'], params['cls_b2p'])

    return out.reshape(B, OUT_PAD)[:, :NCLASS]


# ----------------------- deterministic parameter init -----------------------
def init_params(key):
    keys = iter(jax.random.split(key, 64))

    def nrm(shape, scale=0.02):
        return (scale * jax.random.normal(next(keys), shape)).astype(jnp.float32)

    def zeros(shape):
        return jnp.zeros(shape, jnp.float32)

    def ones(shape):
        return jnp.ones(shape, jnp.float32)

    # Weights stored (in_features, out_features) so every matmul is x @ W + b.
    # TODO(synk): loading real PyTorch nn.Linear weights requires transposing to
    # (in, out), concatenating+scaling into wqkv, and zero-padding cls_w2/cls_b2.
    qscale = 1.0 / math.sqrt(HD)
    wq, wk, wv = nrm((NLAYERS, D, D)), nrm((NLAYERS, D, D)), nrm((NLAYERS, D, D))
    bq, bk, bv = zeros((NLAYERS, 1, D)), zeros((NLAYERS, 1, D)), zeros((NLAYERS, 1, D))
    # fused QKV weight with the 1/sqrt(HD) score scale folded into the Q slice
    wqkv = jnp.concatenate([wq * qscale, wk, wv], axis=-1)       # (NLAYERS, D, 3D)
    bqkv = jnp.concatenate([bq * qscale, bk, bv], axis=-1)       # (NLAYERS, 1, 3D)

    cls_w2 = nrm((CLS_H, NCLASS))
    cls_b2 = zeros((1, NCLASS))
    cls_w2p = jnp.zeros((CLS_H, OUT_PAD), jnp.float32).at[:, :NCLASS].set(cls_w2)
    cls_b2p = jnp.zeros((1, OUT_PAD), jnp.float32).at[:, :NCLASS].set(cls_b2)

    return {
        'word_emb': nrm((VOCAB, D)),
        'pos_emb': nrm((MAX_POS, D)),
        'type_emb': nrm((TYPE_VOCAB, D)),
        'emb_ln_g': ones((1, D)), 'emb_ln_b': zeros((1, D)),
        'wqkv': wqkv, 'bqkv': bqkv,
        'wo': nrm((NLAYERS, D, D)), 'bo': zeros((NLAYERS, 1, D)),
        'ln1_g': ones((NLAYERS, 1, D)), 'ln1_b': zeros((NLAYERS, 1, D)),
        'w1': nrm((NLAYERS, D, DFF)), 'b1': zeros((NLAYERS, 1, DFF)),
        'w2': nrm((NLAYERS, DFF, D)), 'b2': zeros((NLAYERS, 1, D)),
        'ln2_g': ones((NLAYERS, 1, D)), 'ln2_b': zeros((NLAYERS, 1, D)),
        'cls_w1': nrm((D, CLS_H)), 'cls_b1': zeros((1, CLS_H)),
        'cls_w2p': cls_w2p, 'cls_b2p': cls_b2p,
    }


if __name__ == "__main__":
    B, S = 2, 8
    key = jax.random.PRNGKey(0)
    kp, kid = jax.random.split(key)
    params = init_params(kp)

    input_ids = jax.random.randint(kid, (B, S), 0, VOCAB, dtype=jnp.int32)
    attention_mask = jnp.array([[1, 1, 1, 1, 1, 1, 1, 1],
                                [1, 1, 1, 1, 1, 0, 0, 0]], dtype=jnp.int32)

    logits = bert_classifier_forward(input_ids, attention_mask, params)
    logits = jax.block_until_ready(logits)

    assert logits.shape == (B, NCLASS), logits.shape
    assert bool(jnp.all(jnp.isfinite(logits)))
    print("KERNEL_OK")
</pallas_src>

<mosaic_0001>
module attributes {stable_mosaic.version = 11 : i64} {
  func.func @fused_bert_kernel(%arg0: i32, %arg1: memref<1x16x1xi32, #tpu.memory_space<vmem>>, %arg2: memref<1x2x8xi32, #tpu.memory_space<vmem>>, %arg3: memref<100x32xf32, #tpu.memory_space<vmem>>, %arg4: memref<64x32xf32, #tpu.memory_space<vmem>>, %arg5: memref<2x32xf32, #tpu.memory_space<vmem>>, %arg6: memref<1x32xf32, #tpu.memory_space<vmem>>, %arg7: memref<1x32xf32, #tpu.memory_space<vmem>>, %arg8: memref<2x32x96xf32, #tpu.memory_space<vmem>>, %arg9: memref<2x1x96xf32, #tpu.memory_space<vmem>>, %arg10: memref<2x32x32xf32, #tpu.memory_space<vmem>>, %arg11: memref<2x1x32xf32, #tpu.memory_space<vmem>>, %arg12: memref<2x1x32xf32, #tpu.memory_space<vmem>>, %arg13: memref<2x1x32xf32, #tpu.memory_space<vmem>>, %arg14: memref<2x32x128xf32, #tpu.memory_space<vmem>>, %arg15: memref<2x1x128xf32, #tpu.memory_space<vmem>>, %arg16: memref<2x128x32xf32, #tpu.memory_space<vmem>>, %arg17: memref<2x1x32xf32, #tpu.memory_space<vmem>>, %arg18: memref<2x1x32xf32, #tpu.memory_space<vmem>>, %arg19: memref<2x1x32xf32, #tpu.memory_space<vmem>>, %arg20: memref<32x50xf32, #tpu.memory_space<vmem>>, %arg21: memref<1x50xf32, #tpu.memory_space<vmem>>, %arg22: memref<50x128xf32, #tpu.memory_space<vmem>>, %arg23: memref<1x128xf32, #tpu.memory_space<vmem>>, %arg24: memref<1x2x128xf32, #tpu.memory_space<vmem>>) attributes {dimension_semantics = [#tpu.dimension_semantics<parallel>], iteration_bounds = array<i64: 1>, scalar_prefetch = 0 : i64, scratch_operands = 0 : i64, tpu.core_type = #tpu.core_type<tc>, window_params = [{transform_indices = @transform_0, window_bounds = array<i64: 1, 16, 1>}, {transform_indices = @transform_1, window_bounds = array<i64: 1, 2, 8>}, {pipeline_mode = #tpu.pipeline_mode<synchronous>, transform_indices = @transform_2, window_bounds = array<i64: 100, 32>}, {pipeline_mode = #tpu.pipeline_mode<synchronous>, transform_indices = @transform_3, window_bounds = array<i64: 64, 32>}, {pipeline_mode = #tpu.pipeline_mode<synchronous>, transform_indices = @transform_4, window_bounds = array<i64: 2, 32>}, {pipeline_mode = #tpu.pipeline_mode<synchronous>, transform_indices = @transform_5, window_bounds = array<i64: 1, 32>}, {pipeline_mode = #tpu.pipeline_mode<synchronous>, transform_indices = @transform_6, window_bounds = array<i64: 1, 32>}, {pipeline_mode = #tpu.pipeline_mode<synchronous>, transform_indices = @transform_7, window_bounds = array<i64: 2, 32, 96>}, {pipeline_mode = #tpu.pipeline_mode<synchronous>, transform_indices = @transform_8, window_bounds = array<i64: 2, 1, 96>}, {pipeline_mode = #tpu.pipeline_mode<synchronous>, transform_indices = @transform_9, window_bounds = array<i64: 2, 32, 32>}, {pipeline_mode = #tpu.pipeline_mode<synchronous>, transform_indices = @transform_10, window_bounds = array<i64: 2, 1, 32>}, {pipeline_mode = #tpu.pipeline_mode<synchronous>, transform_indices = @transform_11, window_bounds = array<i64: 2, 1, 32>}, {pipeline_mode = #tpu.pipeline_mode<synchronous>, transform_indices = @transform_12, window_bounds = array<i64: 2, 1, 32>}, {pipeline_mode = #tpu.pipeline_mode<synchronous>, transform_indices = @transform_13, window_bounds = array<i64: 2, 32, 128>}, {pipeline_mode = #tpu.pipeline_mode<synchronous>, transform_indices = @transform_14, window_bounds = array<i64: 2, 1, 128>}, {pipeline_mode = #tpu.pipeline_mode<synchronous>, transform_indices = @transform_15, window_bounds = array<i64: 2, 128, 32>}, {pipeline_mode = #tpu.pipeline_mode<synchronous>, transform_indices = @transform_16, window_bounds = array<i64: 2, 1, 32>}, {pipeline_mode = #tpu.pipeline_mode<synchronous>, transform_indices = @transform_17, window_bounds = array<i64: 2, 1, 32>}, {pipeline_mode = #tpu.pipeline_mode<synchronous>, transform_indices = @transform_18, window_bounds = array<i64: 2, 1, 32>}, {pipeline_mode = #tpu.pipeline_mode<synchronous>, transform_indices = @transform_19, window_bounds = array<i64: 32, 50>}, {pipeline_mode = #tpu.pipeline_mode<synchronous>, transform_indices = @transform_20, window_bounds = array<i64: 1, 50>}, {pipeline_mode = #tpu.pipeline_mode<synchronous>, transform_indices = @transform_21, window_bounds = array<i64: 50, 128>}, {pipeline_mode = #tpu.pipeline_mode<synchronous>, transform_indices = @transform_22, window_bounds = array<i64: 1, 128>}, {transform_indices = @transform_23, window_bounds = array<i64: 1, 2, 128>}]} {
    %c0 = arith.constant 0 : index
    %c0_0 = arith.constant 0 : index
    %c0_1 = arith.constant 0 : index
    %0 = vector.load %arg1[%c0, %c0_0, %c0_1] : memref<1x16x1xi32, #tpu.memory_space<vmem>>, vector<1x16x1xi32>
    %1 = vector.shape_cast %0 : vector<1x16x1xi32> to vector<16x1xi32>
    %2 = tpu.iota {dimensions = array<i32: 1>} : vector<16x100xi32>
    %3 = vector.broadcast %1 : vector<16x1xi32> to vector<16x100xi32>
    %4 = arith.cmpi eq, %3, %2 : vector<16x100xi32>
    %5 = arith.extui %4 : vector<16x100xi1> to vector<16x100xi32>
    %6 = arith.sitofp %5 : vector<16x100xi32> to vector<16x100xf32>
    %c0_2 = arith.constant 0 : index
    %c0_3 = arith.constant 0 : index
    %7 = vector.load %arg3[%c0_2, %c0_3] : memref<100x32xf32, #tpu.memory_space<vmem>>, vector<100x32xf32>
    %cst = arith.constant dense<0.000000e+00> : vector<16x32xf32>
    %8 = tpu.matmul %6, %7, %cst {dimension_numbers = #tpu.dot_dimension_numbers<[1], [0], [0], [1], [0, 0, 1, 1], [], []>} : vector<16x100xf32>, vector<100x32xf32>, vector<16x32xf32> -> vector<16x32xf32>
    %9 = vector.shape_cast %8 : vector<16x32xf32> to vector<2x8x32xf32>
    %c0_4 = arith.constant 0 : index
    %c0_5 = arith.constant 0 : index
    %10 = vector.load %arg4[%c0_4, %c0_5] : memref<64x32xf32, #tpu.memory_space<vmem>>, vector<8x32xf32>
    %11 = vector.shape_cast %10 : vector<8x32xf32> to vector<1x8x32xf32>
    %12 = vector.broadcast %11 : vector<1x8x32xf32> to vector<2x8x32xf32>
    %13 = arith.addf %9, %12 : vector<2x8x32xf32>
    %c0_6 = arith.constant 0 : index
    %c0_7 = arith.constant 0 : index
    %14 = vector.load %arg5[%c0_6, %c0_7] : memref<2x32xf32, #tpu.memory_space<vmem>>, vector<1x32xf32>
    %15 = vector.shape_cast %14 : vector<1x32xf32> to vector<1x1x32xf32>
    %16 = vector.broadcast %15 : vector<1x1x32xf32> to vector<2x8x32xf32>
    %17 = arith.addf %13, %16 : vector<2x8x32xf32>
    %18 = vector.shape_cast %17 : vector<2x8x32xf32> to vector<16x32xf32>
    %c0_8 = arith.constant 0 : index
    %c0_9 = arith.constant 0 : index
    %19 = vector.load %arg6[%c0_8, %c0_9] : memref<1x32xf32, #tpu.memory_space<vmem>>, vector<1x32xf32>
    %c0_10 = arith.constant 0 : index
    %c0_11 = arith.constant 0 : index
    %20 = vector.load %arg7[%c0_10, %c0_11] : memref<1x32xf32, #tpu.memory_space<vmem>>, vector<1x32xf32>
    %cst_12 = arith.constant dense<0.000000e+00> : vector<16xf32>
    %21 = vector.multi_reduction <add>, %18, %cst_12 [1] : vector<16x32xf32> to vector<16xf32>
    %22 = vector.shape_cast %21 : vector<16xf32> to vector<16x1xf32>
    %cst_13 = arith.constant 3.200000e+01 : f32
    %23 = vector.broadcast %cst_13 : f32 to vector<16x1xf32>
    %24 = arith.divf %22, %23 : vector<16x1xf32>
    %25 = vector.broadcast %24 : vector<16x1xf32> to vector<16x32xf32>
    %26 = arith.subf %18, %25 : vector<16x32xf32>
    %27 = arith.mulf %26, %26 : vector<16x32xf32>
    %cst_14 = arith.constant dense<0.000000e+00> : vector<16xf32>
    %28 = vector.multi_reduction <add>, %27, %cst_14 [1] : vector<16x32xf32> to vector<16xf32>
    %29 = vector.shape_cast %28 : vector<16xf32> to vector<16x1xf32>
    %cst_15 = arith.constant 3.200000e+01 : f32
    %30 = vector.broadcast %cst_15 : f32 to vector<16x1xf32>
    %31 = arith.divf %29, %30 : vector<16x1xf32>
    %cst_16 = arith.constant 9.99999996E-13 : f32
    %32 = vector.broadcast %cst_16 : f32 to vector<16x1xf32>
    %33 = arith.addf %31, %32 : vector<16x1xf32>
    %34 = math.rsqrt %33 : vector<16x1xf32>
    %35 = vector.broadcast %34 : vector<16x1xf32> to vector<16x32xf32>
    %36 = arith.mulf %26, %35 : vector<16x32xf32>
    %37 = vector.broadcast %19 : vector<1x32xf32> to vector<16x32xf32>
    %38 = arith.mulf %36, %37 : vector<16x32xf32>
    %39 = vector.broadcast %20 : vector<1x32xf32> to vector<16x32xf32>
    %40 = arith.addf %38, %39 : vector<16x32xf32>
    %c0_17 = arith.constant 0 : index
    %c0_18 = arith.constant 0 : index
    %c0_19 = arith.constant 0 : index
    %41 = vector.load %arg2[%c0_17, %c0_18, %c0_19] : memref<1x2x8xi32, #tpu.memory_space<vmem>>, vector<1x2x8xi32>
    %42 = vector.shape_cast %41 : vector<1x2x8xi32> to vector<2x8xi32>
    %43 = arith.sitofp %42 : vector<2x8xi32> to vector<2x8xf32>
    %cst_20 = arith.constant 1.000000e+00 : f32
    %44 = vector.broadcast %cst_20 : f32 to vector<2x8xf32>
    %45 = arith.subf %44, %43 : vector<2x8xf32>
    %cst_21 = arith.constant -1.000000e+04 : f32
    %46 = vector.broadcast %cst_21 : f32 to vector<2x8xf32>
    %47 = arith.mulf %45, %46 : vector<2x8xf32>
    %48 = vector.shape_cast %47 : vector<2x8xf32> to vector<2x1x8xf32>
    %49 = vector.shape_cast %48 : vector<2x1x8xf32> to vector<2x1x8xf32>
    %50 = vector.broadcast %49 : vector<2x1x8xf32> to vector<2x8x8xf32>
    %51 = tpu.concatenate %50, %50 in 0 : vector<2x8x8xf32>, vector<2x8x8xf32> -> vector<4x8x8xf32>
    %c0_22 = arith.constant 0 : index
    %c0_23 = arith.constant 0 : index
    %c0_24 = arith.constant 0 : index
    %52 = vector.load %arg8[%c0_22, %c0_23, %c0_24] : memref<2x32x96xf32, #tpu.memory_space<vmem>>, vector<1x32x96xf32>
    %53 = vector.shape_cast %52 : vector<1x32x96xf32> to vector<32x96xf32>
    %cst_25 = arith.constant dense<0.000000e+00> : vector<16x96xf32>
    %54 = tpu.matmul %40, %53, %cst_25 {dimension_numbers = #tpu.dot_dimension_numbers<[1], [0], [0], [1], [0, 0, 1, 1], [], []>} : vector<16x32xf32>, vector<32x96xf32>, vector<16x96xf32> -> vector<16x96xf32>
    %c0_26 = arith.constant 0 : index
    %c0_27 = arith.constant 0 : index
    %c0_28 = arith.constant 0 : index
    %55 = vector.load %arg9[%c0_26, %c0_27, %c0_28] : memref<2x1x96xf32, #tpu.memory_space<vmem>>, vector<1x1x96xf32>
    %56 = vector.shape_cast %55 : vector<1x1x96xf32> to vector<1x96xf32>
    %57 = vector.broadcast %56 : vector<1x96xf32> to vector<16x96xf32>
    %58 = arith.addf %54, %57 : vector<16x96xf32>
    %59 = vector.extract_strided_slice %58 {offsets = [0, 0], sizes = [16, 16], strides = [1, 1]} : vector<16x96xf32> to vector<16x16xf32>
    %60 = vector.shape_cast %59 : vector<16x16xf32> to vector<2x8x16xf32>
    %61 = vector.extract_strided_slice %58 {offsets = [0, 16], sizes = [16, 16], strides = [1, 1]} : vector<16x96xf32> to vector<16x16xf32>
    %62 = vector.shape_cast %61 : vector<16x16xf32> to vector<2x8x16xf32>
    %63 = tpu.concatenate %60, %62 in 0 : vector<2x8x16xf32>, vector<2x8x16xf32> -> vector<4x8x16xf32>
    %64 = vector.extract_strided_slice %58 {offsets = [0, 32], sizes = [16, 16], strides = [1, 1]} : vector<16x96xf32> to vector<16x16xf32>
    %65 = vector.shape_cast %64 : vector<16x16xf32> to vector<2x8x16xf32>
    %66 = vector.extract_strided_slice %58 {offsets = [0, 48], sizes = [16, 16], strides = [1, 1]} : vector<16x96xf32> to vector<16x16xf32>
    %67 = vector.shape_cast %66 : vector<16x16xf32> to vector<2x8x16xf32>
    %68 = tpu.concatenate %65, %67 in 0 : vector<2x8x16xf32>, vector<2x8x16xf32> -> vector<4x8x16xf32>
    %69 = vector.extract_strided_slice %58 {offsets = [0, 64], sizes = [16, 16], strides = [1, 1]} : vector<16x96xf32> to vector<16x16xf32>
    %70 = vector.shape_cast %69 : vector<16x16xf32> to vector<2x8x16xf32>
    %71 = vector.extract_strided_slice %58 {offsets = [0, 80], sizes = [16, 16], strides = [1, 1]} : vector<16x96xf32> to vector<16x16xf32>
    %72 = vector.shape_cast %71 : vector<16x16xf32> to vector<2x8x16xf32>
    %73 = tpu.concatenate %70, %72 in 0 : vector<2x8x16xf32>, vector<2x8x16xf32> -> vector<4x8x16xf32>
    %cst_29 = arith.constant dense<0.000000e+00> : vector<4x8x8xf32>
    %74 = tpu.matmul %63, %68, %cst_29 {dimension_numbers = #tpu.dot_dimension_numbers<[2], [2], [1], [1], [0, 0, 0, 1, 1, 1], [0], [0]>} : vector<4x8x16xf32>, vector<4x8x16xf32>, vector<4x8x8xf32> -> vector<4x8x8xf32>
    %75 = arith.addf %74, %51 : vector<4x8x8xf32>
    %cst_30 = arith.constant dense<0xFF800000> : vector<4x8xf32>
    %76 = vector.multi_reduction <maximumf>, %75, %cst_30 [2] : vector<4x8x8xf32> to vector<4x8xf32>
    %77 = vector.shape_cast %76 : vector<4x8xf32> to vector<4x8x1xf32>
    %78 = vector.broadcast %77 : vector<4x8x1xf32> to vector<4x8x8xf32>
    %79 = arith.subf %75, %78 : vector<4x8x8xf32>
    %80 = math.exp %79 : vector<4x8x8xf32>
    %cst_31 = arith.constant dense<0.000000e+00> : vector<4x8xf32>
    %81 = vector.multi_reduction <add>, %80, %cst_31 [2] : vector<4x8x8xf32> to vector<4x8xf32>
    %82 = vector.shape_cast %81 : vector<4x8xf32> to vector<4x8x1xf32>
    %83 = tpu.reciprocal %82 {approx = true} : vector<4x8x1xf32> -> vector<4x8x1xf32>
    %84 = vector.broadcast %83 : vector<4x8x1xf32> to vector<4x8x8xf32>
    %85 = arith.mulf %80, %84 : vector<4x8x8xf32>
    %cst_32 = arith.constant dense<0.000000e+00> : vector<4x8x16xf32>
    %86 = tpu.matmul %85, %73, %cst_32 {dimension_numbers = #tpu.dot_dimension_numbers<[2], [1], [1], [2], [0, 0, 0, 1, 1, 2], [0], [0]>} : vector<4x8x8xf32>, vector<4x8x16xf32>, vector<4x8x16xf32> -> vector<4x8x16xf32>
    %87 = vector.shape_cast %86 : vector<4x8x16xf32> to vector<2x2x8x16xf32>
    %88 = vector.extract_strided_slice %87 {offsets = [0, 0, 0, 0], sizes = [1, 2, 8, 16], strides = [1, 1, 1, 1]} : vector<2x2x8x16xf32> to vector<1x2x8x16xf32>
    %89 = vector.shape_cast %88 : vector<1x2x8x16xf32> to vector<2x8x16xf32>
    %90 = vector.extract_strided_slice %87 {offsets = [1, 0, 0, 0], sizes = [1, 2, 8, 16], strides = [1, 1, 1, 1]} : vector<2x2x8x16xf32> to vector<1x2x8x16xf32>
    %91 = vector.shape_cast %90 : vector<1x2x8x16xf32> to vector<2x8x16xf32>
    %92 = tpu.concatenate %89, %91 in 2 : vector<2x8x16xf32>, vector<2x8x16xf32> -> vector<2x8x32xf32>
    %93 = vector.shape_cast %92 : vector<2x8x32xf32> to vector<16x32xf32>
    %c0_33 = arith.constant 0 : index
    %c0_34 = arith.constant 0 : index
    %c0_35 = arith.constant 0 : index
    %94 = vector.load %arg10[%c0_33, %c0_34, %c0_35] : memref<2x32x32xf32, #tpu.memory_space<vmem>>, vector<1x32x32xf32>
    %95 = vector.shape_cast %94 : vector<1x32x32xf32> to vector<32x32xf32>
    %cst_36 = arith.constant dense<0.000000e+00> : vector<16x32xf32>
    %96 = tpu.matmul %93, %95, %cst_36 {dimension_numbers = #tpu.dot_dimension_numbers<[1], [0], [0], [1], [0, 0, 1, 1], [], []>} : vector<16x32xf32>, vector<32x32xf32>, vector<16x32xf32> -> vector<16x32xf32>
    %c0_37 = arith.constant 0 : index
    %c0_38 = arith.constant 0 : index
    %c0_39 = arith.constant 0 : index
    %97 = vector.load %arg11[%c0_37, %c0_38, %c0_39] : memref<2x1x32xf32, #tpu.memory_space<vmem>>, vector<1x1x32xf32>
    %98 = vector.shape_cast %97 : vector<1x1x32xf32> to vector<1x32xf32>
    %99 = vector.broadcast %98 : vector<1x32xf32> to vector<16x32xf32>
    %100 = arith.addf %96, %99 : vector<16x32xf32>
    %101 = arith.addf %40, %100 : vector<16x32xf32>
    %c0_40 = arith.constant 0 : index
    %c0_41 = arith.constant 0 : index
    %c0_42 = arith.constant 0 : index
    %102 = vector.load %arg12[%c0_40, %c0_41, %c0_42] : memref<2x1x32xf32, #tpu.memory_space<vmem>>, vector<1x1x32xf32>
    %103 = vector.shape_cast %102 : vector<1x1x32xf32> to vector<1x32xf32>
    %c0_43 = arith.constant 0 : index
    %c0_44 = arith.constant 0 : index
    %c0_45 = arith.constant 0 : index
    %104 = vector.load %arg13[%c0_43, %c0_44, %c0_45] : memref<2x1x32xf32, #tpu.memory_space<vmem>>, vector<1x1x32xf32>
    %105 = vector.shape_cast %104 : vector<1x1x32xf32> to vector<1x32xf32>
    %cst_46 = arith.constant dense<0.000000e+00> : vector<16xf32>
    %106 = vector.multi_reduction <add>, %101, %cst_46 [1] : vector<16x32xf32> to vector<16xf32>
    %107 = vector.shape_cast %106 : vector<16xf32> to vector<16x1xf32>
    %cst_47 = arith.constant 3.200000e+01 : f32
    %108 = vector.broadcast %cst_47 : f32 to vector<16x1xf32>
    %109 = arith.divf %107, %108 : vector<16x1xf32>
    %110 = vector.broadcast %109 : vector<16x1xf32> to vector<16x32xf32>
    %111 = arith.subf %101, %110 : vector<16x32xf32>
    %112 = arith.mulf %111, %111 : vector<16x32xf32>
    %cst_48 = arith.constant dense<0.000000e+00> : vector<16xf32>
    %113 = vector.multi_reduction <add>, %112, %cst_48 [1] : vector<16x32xf32> to vector<16xf32>
    %114 = vector.shape_cast %113 : vector<16xf32> to vector<16x1xf32>
    %cst_49 = arith.constant 3.200000e+01 : f32
    %115 = vector.broadcast %cst_49 : f32 to vector<16x1xf32>
    %116 = arith.divf %114, %115 : vector<16x1xf32>
    %cst_50 = arith.constant 9.99999996E-13 : f32
    %117 = vector.broadcast %cst_50 : f32 to vector<16x1xf32>
    %118 = arith.addf %116, %117 : vector<16x1xf32>
    %119 = math.rsqrt %118 : vector<16x1xf32>
    %120 = vector.broadcast %119 : vector<16x1xf32> to vector<16x32xf32>
    %121 = arith.mulf %111, %120 : vector<16x32xf32>
    %122 = vector.broadcast %103 : vector<1x32xf32> to vector<16x32xf32>
    %123 = arith.mulf %121, %122 : vector<16x32xf32>
    %124 = vector.broadcast %105 : vector<1x32xf32> to vector<16x32xf32>
    %125 = arith.addf %123, %124 : vector<16x32xf32>
    %c0_51 = arith.constant 0 : index
    %c0_52 = arith.constant 0 : index
    %c0_53 = arith.constant 0 : index
    %126 = vector.load %arg14[%c0_51, %c0_52, %c0_53] : memref<2x32x128xf32, #tpu.memory_space<vmem>>, vector<1x32x128xf32>
    %127 = vector.shape_cast %126 : vector<1x32x128xf32> to vector<32x128xf32>
    %cst_54 = arith.constant dense<0.000000e+00> : vector<16x128xf32>
    %128 = tpu.matmul %125, %127, %cst_54 {dimension_numbers = #tpu.dot_dimension_numbers<[1], [0], [0], [1], [0, 0, 1, 1], [], []>} : vector<16x32xf32>, vector<32x128xf32>, vector<16x128xf32> -> vector<16x128xf32>
    %c0_55 = arith.constant 0 : index
    %c0_56 = arith.constant 0 : index
    %c0_57 = arith.constant 0 : index
    %129 = vector.load %arg15[%c0_55, %c0_56, %c0_57] : memref<2x1x128xf32, #tpu.memory_space<vmem>>, vector<1x1x128xf32>
    %130 = vector.shape_cast %129 : vector<1x1x128xf32> to vector<1x128xf32>
    %131 = vector.broadcast %130 : vector<1x128xf32> to vector<16x128xf32>
    %132 = arith.addf %128, %131 : vector<16x128xf32>
    %cst_58 = arith.constant 5.000000e-01 : f32
    %133 = vector.broadcast %cst_58 : f32 to vector<16x128xf32>
    %134 = arith.mulf %133, %132 : vector<16x128xf32>
    %cst_59 = arith.constant 4.471500e-02 : f32
    %135 = vector.broadcast %cst_59 : f32 to vector<16x128xf32>
    %136 = arith.mulf %135, %132 : vector<16x128xf32>
    %137 = arith.mulf %136, %132 : vector<16x128xf32>
    %138 = arith.mulf %137, %132 : vector<16x128xf32>
    %139 = arith.addf %132, %138 : vector<16x128xf32>
    %cst_60 = arith.constant 0.797884583 : f32
    %140 = vector.broadcast %cst_60 : f32 to vector<16x128xf32>
    %141 = arith.mulf %140, %139 : vector<16x128xf32>
    %142 = math.tanh %141 : vector<16x128xf32>
    %cst_61 = arith.constant 1.000000e+00 : f32
    %143 = vector.broadcast %cst_61 : f32 to vector<16x128xf32>
    %144 = arith.addf %143, %142 : vector<16x128xf32>
    %145 = arith.mulf %134, %144 : vector<16x128xf32>
    %c0_62 = arith.constant 0 : index
    %c0_63 = arith.constant 0 : index
    %c0_64 = arith.constant 0 : index
    %146 = vector.load %arg16[%c0_62, %c0_63, %c0_64] : memref<2x128x32xf32, #tpu.memory_space<vmem>>, vector<1x128x32xf32>
    %147 = vector.shape_cast %146 : vector<1x128x32xf32> to vector<128x32xf32>
    %cst_65 = arith.constant dense<0.000000e+00> : vector<16x32xf32>
    %148 = tpu.matmul %145, %147, %cst_65 {dimension_numbers = #tpu.dot_dimension_numbers<[1], [0], [0], [1], [0, 0, 1, 1], [], []>} : vector<16x128xf32>, vector<128x32xf32>, vector<16x32xf32> -> vector<16x32xf32>
    %c0_66 = arith.constant 0 : index
    %c0_67 = arith.constant 0 : index
    %c0_68 = arith.constant 0 : index
    %149 = vector.load %arg17[%c0_66, %c0_67, %c0_68] : memref<2x1x32xf32, #tpu.memory_space<vmem>>, vector<1x1x32xf32>
    %150 = vector.shape_cast %149 : vector<1x1x32xf32> to vector<1x32xf32>
    %151 = vector.broadcast %150 : vector<1x32xf32> to vector<16x32xf32>
    %152 = arith.addf %148, %151 : vector<16x32xf32>
    %153 = arith.addf %125, %152 : vector<16x32xf32>
    %c0_69 = arith.constant 0 : index
    %c0_70 = arith.constant 0 : index
    %c0_71 = arith.constant 0 : index
    %154 = vector.load %arg18[%c0_69, %c0_70, %c0_71] : memref<2x1x32xf32, #tpu.memory_space<vmem>>, vector<1x1x32xf32>
    %155 = vector.shape_cast %154 : vector<1x1x32xf32> to vector<1x32xf32>
    %c0_72 = arith.constant 0 : index
    %c0_73 = arith.constant 0 : index
    %c0_74 = arith.constant 0 : index
    %156 = vector.load %arg19[%c0_72, %c0_73, %c0_74] : memref<2x1x32xf32, #tpu.memory_space<vmem>>, vector<1x1x32xf32>
    %157 = vector.shape_cast %156 : vector<1x1x32xf32> to vector<1x32xf32>
    %cst_75 = arith.constant dense<0.000000e+00> : vector<16xf32>
    %158 = vector.multi_reduction <add>, %153, %cst_75 [1] : vector<16x32xf32> to vector<16xf32>
    %159 = vector.shape_cast %158 : vector<16xf32> to vector<16x1xf32>
    %cst_76 = arith.constant 3.200000e+01 : f32
    %160 = vector.broadcast %cst_76 : f32 to vector<16x1xf32>
    %161 = arith.divf %159, %160 : vector<16x1xf32>
    %162 = vector.broadcast %161 : vector<16x1xf32> to vector<16x32xf32>
    %163 = arith.subf %153, %162 : vector<16x32xf32>
    %164 = arith.mulf %163, %163 : vector<16x32xf32>
    %cst_77 = arith.constant dense<0.000000e+00> : vector<16xf32>
    %165 = vector.multi_reduction <add>, %164, %cst_77 [1] : vector<16x32xf32> to vector<16xf32>
    %166 = vector.shape_cast %165 : vector<16xf32> to vector<16x1xf32>
    %cst_78 = arith.constant 3.200000e+01 : f32
    %167 = vector.broadcast %cst_78 : f32 to vector<16x1xf32>
    %168 = arith.divf %166, %167 : vector<16x1xf32>
    %cst_79 = arith.constant 9.99999996E-13 : f32
    %169 = vector.broadcast %cst_79 : f32 to vector<16x1xf32>
    %170 = arith.addf %168, %169 : vector<16x1xf32>
    %171 = math.rsqrt %170 : vector<16x1xf32>
    %172 = vector.broadcast %171 : vector<16x1xf32> to vector<16x32xf32>
    %173 = arith.mulf %163, %172 : vector<16x32xf32>
    %174 = vector.broadcast %155 : vector<1x32xf32> to vector<16x32xf32>
    %175 = arith.mulf %173, %174 : vector<16x32xf32>
    %176 = vector.broadcast %157 : vector<1x32xf32> to vector<16x32xf32>
    %177 = arith.addf %175, %176 : vector<16x32xf32>
    %c1 = arith.constant 1 : index
    %c0_80 = arith.constant 0 : index
    %c0_81 = arith.constant 0 : index
    %178 = vector.load %arg8[%c1, %c0_80, %c0_81] : memref<2x32x96xf32, #tpu.memory_space<vmem>>, vector<1x32x96xf32>
    %179 = vector.shape_cast %178 : vector<1x32x96xf32> to vector<32x96xf32>
    %cst_82 = arith.constant dense<0.000000e+00> : vector<16x96xf32>
    %180 = tpu.matmul %177, %179, %cst_82 {dimension_numbers = #tpu.dot_dimension_numbers<[1], [0], [0], [1], [0, 0, 1, 1], [], []>} : vector<16x32xf32>, vector<32x96xf32>, vector<16x96xf32> -> vector<16x96xf32>
    %c1_83 = arith.constant 1 : index
    %c0_84 = arith.constant 0 : index
    %c0_85 = arith.constant 0 : index
    %181 = vector.load %arg9[%c1_83, %c0_84, %c0_85] : memref<2x1x96xf32, #tpu.memory_space<vmem>>, vector<1x1x96xf32>
    %182 = vector.shape_cast %181 : vector<1x1x96xf32> to vector<1x96xf32>
    %183 = vector.broadcast %182 : vector<1x96xf32> to vector<16x96xf32>
    %184 = arith.addf %180, %183 : vector<16x96xf32>
    %185 = vector.extract_strided_slice %184 {offsets = [0, 0], sizes = [16, 16], strides = [1, 1]} : vector<16x96xf32> to vector<16x16xf32>
    %186 = vector.shape_cast %185 : vector<16x16xf32> to vector<2x8x16xf32>
    %187 = vector.extract_strided_slice %184 {offsets = [0, 16], sizes = [16, 16], strides = [1, 1]} : vector<16x96xf32> to vector<16x16xf32>
    %188 = vector.shape_cast %187 : vector<16x16xf32> to vector<2x8x16xf32>
    %189 = tpu.concatenate %186, %188 in 0 : vector<2x8x16xf32>, vector<2x8x16xf32> -> vector<4x8x16xf32>
    %190 = vector.extract_strided_slice %184 {offsets = [0, 32], sizes = [16, 16], strides = [1, 1]} : vector<16x96xf32> to vector<16x16xf32>
    %191 = vector.shape_cast %190 : vector<16x16xf32> to vector<2x8x16xf32>
    %192 = vector.extract_strided_slice %184 {offsets = [0, 48], sizes = [16, 16], strides = [1, 1]} : vector<16x96xf32> to vector<16x16xf32>
    %193 = vector.shape_cast %192 : vector<16x16xf32> to vector<2x8x16xf32>
    %194 = tpu.concatenate %191, %193 in 0 : vector<2x8x16xf32>, vector<2x8x16xf32> -> vector<4x8x16xf32>
    %195 = vector.extract_strided_slice %184 {offsets = [0, 64], sizes = [16, 16], strides = [1, 1]} : vector<16x96xf32> to vector<16x16xf32>
    %196 = vector.shape_cast %195 : vector<16x16xf32> to vector<2x8x16xf32>
    %197 = vector.extract_strided_slice %184 {offsets = [0, 80], sizes = [16, 16], strides = [1, 1]} : vector<16x96xf32> to vector<16x16xf32>
    %198 = vector.shape_cast %197 : vector<16x16xf32> to vector<2x8x16xf32>
    %199 = tpu.concatenate %196, %198 in 0 : vector<2x8x16xf32>, vector<2x8x16xf32> -> vector<4x8x16xf32>
    %cst_86 = arith.constant dense<0.000000e+00> : vector<4x8x8xf32>
    %200 = tpu.matmul %189, %194, %cst_86 {dimension_numbers = #tpu.dot_dimension_numbers<[2], [2], [1], [1], [0, 0, 0, 1, 1, 1], [0], [0]>} : vector<4x8x16xf32>, vector<4x8x16xf32>, vector<4x8x8xf32> -> vector<4x8x8xf32>
    %201 = arith.addf %200, %51 : vector<4x8x8xf32>
    %cst_87 = arith.constant dense<0xFF800000> : vector<4x8xf32>
    %202 = vector.multi_reduction <maximumf>, %201, %cst_87 [2] : vector<4x8x8xf32> to vector<4x8xf32>
    %203 = vector.shape_cast %202 : vector<4x8xf32> to vector<4x8x1xf32>
    %204 = vector.broadcast %203 : vector<4x8x1xf32> to vector<4x8x8xf32>
    %205 = arith.subf %201, %204 : vector<4x8x8xf32>
    %206 = math.exp %205 : vector<4x8x8xf32>
    %cst_88 = arith.constant dense<0.000000e+00> : vector<4x8xf32>
    %207 = vector.multi_reduction <add>, %206, %cst_88 [2] : vector<4x8x8xf32> to vector<4x8xf32>
    %208 = vector.shape_cast %207 : vector<4x8xf32> to vector<4x8x1xf32>
    %209 = tpu.reciprocal %208 {approx = true} : vector<4x8x1xf32> -> vector<4x8x1xf32>
    %210 = vector.broadcast %209 : vector<4x8x1xf32> to vector<4x8x8xf32>
    %211 = arith.mulf %206, %210 : vector<4x8x8xf32>
    %cst_89 = arith.constant dense<0.000000e+00> : vector<4x8x16xf32>
    %212 = tpu.matmul %211, %199, %cst_89 {dimension_numbers = #tpu.dot_dimension_numbers<[2], [1], [1], [2], [0, 0, 0, 1, 1, 2], [0], [0]>} : vector<4x8x8xf32>, vector<4x8x16xf32>, vector<4x8x16xf32> -> vector<4x8x16xf32>
    %213 = vector.shape_cast %212 : vector<4x8x16xf32> to vector<2x2x8x16xf32>
    %214 = vector.extract_strided_slice %213 {offsets = [0, 0, 0, 0], sizes = [1, 2, 8, 16], strides = [1, 1, 1, 1]} : vector<2x2x8x16xf32> to vector<1x2x8x16xf32>
    %215 = vector.shape_cast %214 : vector<1x2x8x16xf32> to vector<2x8x16xf32>
    %216 = vector.extract_strided_slice %213 {offsets = [1, 0, 0, 0], sizes = [1, 2, 8, 16], strides = [1, 1, 1, 1]} : vector<2x2x8x16xf32> to vector<1x2x8x16xf32>
    %217 = vector.shape_cast %216 : vector<1x2x8x16xf32> to vector<2x8x16xf32>
    %218 = tpu.concatenate %215, %217 in 2 : vector<2x8x16xf32>, vector<2x8x16xf32> -> vector<2x8x32xf32>
    %219 = vector.shape_cast %218 : vector<2x8x32xf32> to vector<16x32xf32>
    %c1_90 = arith.constant 1 : index
    %c0_91 = arith.constant 0 : index
    %c0_92 = arith.constant 0 : index
    %220 = vector.load %arg10[%c1_90, %c0_91, %c0_92] : memref<2x32x32xf32, #tpu.memory_space<vmem>>, vector<1x32x32xf32>
    %221 = vector.shape_cast %220 : vector<1x32x32xf32> to vector<32x32xf32>
    %cst_93 = arith.constant dense<0.000000e+00> : vector<16x32xf32>
    %222 = tpu.matmul %219, %221, %cst_93 {dimension_numbers = #tpu.dot_dimension_numbers<[1], [0], [0], [1], [0, 0, 1, 1], [], []>} : vector<16x32xf32>, vector<32x32xf32>, vector<16x32xf32> -> vector<16x32xf32>
    %c1_94 = arith.constant 1 : index
    %c0_95 = arith.constant 0 : index
    %c0_96 = arith.constant 0 : index
    %223 = vector.load %arg11[%c1_94, %c0_95, %c0_96] : memref<2x1x32xf32, #tpu.memory_space<vmem>>, vector<1x1x32xf32>
    %224 = vector.shape_cast %223 : vector<1x1x32xf32> to vector<1x32xf32>
    %225 = vector.broadcast %224 : vector<1x32xf32> to vector<16x32xf32>
    %226 = arith.addf %222, %225 : vector<16x32xf32>
    %227 = arith.addf %177, %226 : vector<16x32xf32>
    %c1_97 = arith.constant 1 : index
    %c0_98 = arith.constant 0 : index
    %c0_99 = arith.constant 0 : index
    %228 = vector.load %arg12[%c1_97, %c0_98, %c0_99] : memref<2x1x32xf32, #tpu.memory_space<vmem>>, vector<1x1x32xf32>
    %229 = vector.shape_cast %228 : vector<1x1x32xf32> to vector<1x32xf32>
    %c1_100 = arith.constant 1 : index
    %c0_101 = arith.constant 0 : index
    %c0_102 = arith.constant 0 : index
    %230 = vector.load %arg13[%c1_100, %c0_101, %c0_102] : memref<2x1x32xf32, #tpu.memory_space<vmem>>, vector<1x1x32xf32>
    %231 = vector.shape_cast %230 : vector<1x1x32xf32> to vector<1x32xf32>
    %cst_103 = arith.constant dense<0.000000e+00> : vector<16xf32>
    %232 = vector.multi_reduction <add>, %227, %cst_103 [1] : vector<16x32xf32> to vector<16xf32>
    %233 = vector.shape_cast %232 : vector<16xf32> to vector<16x1xf32>
    %cst_104 = arith.constant 3.200000e+01 : f32
    %234 = vector.broadcast %cst_104 : f32 to vector<16x1xf32>
    %235 = arith.divf %233, %234 : vector<16x1xf32>
    %236 = vector.broadcast %235 : vector<16x1xf32> to vector<16x32xf32>
    %237 = arith.subf %227, %236 : vector<16x32xf32>
    %238 = arith.mulf %237, %237 : vector<16x32xf32>
    %cst_105 = arith.constant dense<0.000000e+00> : vector<16xf32>
    %239 = vector.multi_reduction <add>, %238, %cst_105 [1] : vector<16x32xf32> to vector<16xf32>
    %240 = vector.shape_cast %239 : vector<16xf32> to vector<16x1xf32>
    %cst_106 = arith.constant 3.200000e+01 : f32
    %241 = vector.broadcast %cst_106 : f32 to vector<16x1xf32>
    %242 = arith.divf %240, %241 : vector<16x1xf32>
    %cst_107 = arith.constant 9.99999996E-13 : f32
    %243 = vector.broadcast %cst_107 : f32 to vector<16x1xf32>
    %244 = arith.addf %242, %243 : vector<16x1xf32>
    %245 = math.rsqrt %244 : vector<16x1xf32>
    %246 = vector.broadcast %245 : vector<16x1xf32> to vector<16x32xf32>
    %247 = arith.mulf %237, %246 : vector<16x32xf32>
    %248 = vector.broadcast %229 : vector<1x32xf32> to vector<16x32xf32>
    %249 = arith.mulf %247, %248 : vector<16x32xf32>
    %250 = vector.broadcast %231 : vector<1x32xf32> to vector<16x32xf32>
    %251 = arith.addf %249, %250 : vector<16x32xf32>
    %c1_108 = arith.constant 1 : index
    %c0_109 = arith.constant 0 : index
    %c0_110 = arith.constant 0 : index
    %252 = vector.load %arg14[%c1_108, %c0_109, %c0_110] : memref<2x32x128xf32, #tpu.memory_space<vmem>>, vector<1x32x128xf32>
    %253 = vector.shape_cast %252 : vector<1x32x128xf32> to vector<32x128xf32>
    %cst_111 = arith.constant dense<0.000000e+00> : vector<16x128xf32>
    %254 = tpu.matmul %251, %253, %cst_111 {dimension_numbers = #tpu.dot_dimension_numbers<[1], [0], [0], [1], [0, 0, 1, 1], [], []>} : vector<16x32xf32>, vector<32x128xf32>, vector<16x128xf32> -> vector<16x128xf32>
    %c1_112 = arith.constant 1 : index
    %c0_113 = arith.constant 0 : index
    %c0_114 = arith.constant 0 : index
    %255 = vector.load %arg15[%c1_112, %c0_113, %c0_114] : memref<2x1x128xf32, #tpu.memory_space<vmem>>, vector<1x1x128xf32>
    %256 = vector.shape_cast %255 : vector<1x1x128xf32> to vector<1x128xf32>
    %257 = vector.broadcast %256 : vector<1x128xf32> to vector<16x128xf32>
    %258 = arith.addf %254, %257 : vector<16x128xf32>
    %cst_115 = arith.constant 5.000000e-01 : f32
    %259 = vector.broadcast %cst_115 : f32 to vector<16x128xf32>
    %260 = arith.mulf %259, %258 : vector<16x128xf32>
    %cst_116 = arith.constant 4.471500e-02 : f32
    %261 = vector.broadcast %cst_116 : f32 to vector<16x128xf32>
    %262 = arith.mulf %261, %258 : vector<16x128xf32>
    %263 = arith.mulf %262, %258 : vector<16x128xf32>
    %264 = arith.mulf %263, %258 : vector<16x128xf32>
    %265 = arith.addf %258, %264 : vector<16x128xf32>
    %cst_117 = arith.constant 0.797884583 : f32
    %266 = vector.broadcast %cst_117 : f32 to vector<16x128xf32>
    %267 = arith.mulf %266, %265 : vector<16x128xf32>
    %268 = math.tanh %267 : vector<16x128xf32>
    %cst_118 = arith.constant 1.000000e+00 : f32
    %269 = vector.broadcast %cst_118 : f32 to vector<16x128xf32>
    %270 = arith.addf %269, %268 : vector<16x128xf32>
    %271 = arith.mulf %260, %270 : vector<16x128xf32>
    %c1_119 = arith.constant 1 : index
    %c0_120 = arith.constant 0 : index
    %c0_121 = arith.constant 0 : index
    %272 = vector.load %arg16[%c1_119, %c0_120, %c0_121] : memref<2x128x32xf32, #tpu.memory_space<vmem>>, vector<1x128x32xf32>
    %273 = vector.shape_cast %272 : vector<1x128x32xf32> to vector<128x32xf32>
    %cst_122 = arith.constant dense<0.000000e+00> : vector<16x32xf32>
    %274 = tpu.matmul %271, %273, %cst_122 {dimension_numbers = #tpu.dot_dimension_numbers<[1], [0], [0], [1], [0, 0, 1, 1], [], []>} : vector<16x128xf32>, vector<128x32xf32>, vector<16x32xf32> -> vector<16x32xf32>
    %c1_123 = arith.constant 1 : index
    %c0_124 = arith.constant 0 : index
    %c0_125 = arith.constant 0 : index
    %275 = vector.load %arg17[%c1_123, %c0_124, %c0_125] : memref<2x1x32xf32, #tpu.memory_space<vmem>>, vector<1x1x32xf32>
    %276 = vector.shape_cast %275 : vector<1x1x32xf32> to vector<1x32xf32>
    %277 = vector.broadcast %276 : vector<1x32xf32> to vector<16x32xf32>
    %278 = arith.addf %274, %277 : vector<16x32xf32>
    %279 = arith.addf %251, %278 : vector<16x32xf32>
    %c1_126 = arith.constant 1 : index
    %c0_127 = arith.constant 0 : index
    %c0_128 = arith.constant 0 : index
    %280 = vector.load %arg18[%c1_126, %c0_127, %c0_128] : memref<2x1x32xf32, #tpu.memory_space<vmem>>, vector<1x1x32xf32>
    %281 = vector.shape_cast %280 : vector<1x1x32xf32> to vector<1x32xf32>
    %c1_129 = arith.constant 1 : index
    %c0_130 = arith.constant 0 : index
    %c0_131 = arith.constant 0 : index
    %282 = vector.load %arg19[%c1_129, %c0_130, %c0_131] : memref<2x1x32xf32, #tpu.memory_space<vmem>>, vector<1x1x32xf32>
    %283 = vector.shape_cast %282 : vector<1x1x32xf32> to vector<1x32xf32>
    %cst_132 = arith.constant dense<0.000000e+00> : vector<16xf32>
    %284 = vector.multi_reduction <add>, %279, %cst_132 [1] : vector<16x32xf32> to vector<16xf32>
    %285 = vector.shape_cast %284 : vector<16xf32> to vector<16x1xf32>
    %cst_133 = arith.constant 3.200000e+01 : f32
    %286 = vector.broadcast %cst_133 : f32 to vector<16x1xf32>
    %287 = arith.divf %285, %286 : vector<16x1xf32>
    %288 = vector.broadcast %287 : vector<16x1xf32> to vector<16x32xf32>
    %289 = arith.subf %279, %288 : vector<16x32xf32>
    %290 = arith.mulf %289, %289 : vector<16x32xf32>
    %cst_134 = arith.constant dense<0.000000e+00> : vector<16xf32>
    %291 = vector.multi_reduction <add>, %290, %cst_134 [1] : vector<16x32xf32> to vector<16xf32>
    %292 = vector.shape_cast %291 : vector<16xf32> to vector<16x1xf32>
    %cst_135 = arith.constant 3.200000e+01 : f32
    %293 = vector.broadcast %cst_135 : f32 to vector<16x1xf32>
    %294 = arith.divf %292, %293 : vector<16x1xf32>
    %cst_136 = arith.constant 9.99999996E-13 : f32
    %295 = vector.broadcast %cst_136 : f32 to vector<16x1xf32>
    %296 = arith.addf %294, %295 : vector<16x1xf32>
    %297 = math.rsqrt %296 : vector<16x1xf32>
    %298 = vector.broadcast %297 : vector<16x1xf32> to vector<16x32xf32>
    %299 = arith.mulf %289, %298 : vector<16x32xf32>
    %300 = vector.broadcast %281 : vector<1x32xf32> to vector<16x32xf32>
    %301 = arith.mulf %299, %300 : vector<16x32xf32>
    %302 = vector.broadcast %283 : vector<1x32xf32> to vector<16x32xf32>
    %303 = arith.addf %301, %302 : vector<16x32xf32>
    %304 = vector.shape_cast %303 : vector<16x32xf32> to vector<2x8x32xf32>
    %305 = vector.extract_strided_slice %304 {offsets = [0, 0, 0], sizes = [2, 1, 32], strides = [1, 1, 1]} : vector<2x8x32xf32> to vector<2x1x32xf32>
    %306 = vector.shape_cast %305 : vector<2x1x32xf32> to vector<2x32xf32>
    %c0_137 = arith.constant 0 : index
    %c0_138 = arith.constant 0 : index
    %307 = vector.load %arg20[%c0_137, %c0_138] : memref<32x50xf32, #tpu.memory_space<vmem>>, vector<32x50xf32>
    %cst_139 = arith.constant dense<0.000000e+00> : vector<2x50xf32>
    %308 = tpu.matmul %306, %307, %cst_139 {dimension_numbers = #tpu.dot_dimension_numbers<[1], [0], [0], [1], [0, 0, 1, 1], [], []>} : vector<2x32xf32>, vector<32x50xf32>, vector<2x50xf32> -> vector<2x50xf32>
    %c0_140 = arith.constant 0 : index
    %c0_141 = arith.constant 0 : index
    %309 = vector.load %arg21[%c0_140, %c0_141] : memref<1x50xf32, #tpu.memory_space<vmem>>, vector<1x50xf32>
    %310 = vector.broadcast %309 : vector<1x50xf32> to vector<2x50xf32>
    %311 = arith.addf %308, %310 : vector<2x50xf32>
    %cst_142 = arith.constant 0.000000e+00 : f32
    %312 = vector.broadcast %cst_142 : f32 to vector<2x50xf32>
    %313 = arith.maximumf %311, %312 : vector<2x50xf32>
    %c0_143 = arith.constant 0 : index
    %c0_144 = arith.constant 0 : index
    %314 = vector.load %arg22[%c0_143, %c0_144] : memref<50x128xf32, #tpu.memory_space<vmem>>, vector<50x128xf32>
    %cst_145 = arith.constant dense<0.000000e+00> : vector<2x128xf32>
    %315 = tpu.matmul %313, %314, %cst_145 {dimension_numbers = #tpu.dot_dimension_numbers<[1], [0], [0], [1], [0, 0, 1, 1], [], []>} : vector<2x50xf32>, vector<50x128xf32>, vector<2x128xf32> -> vector<2x128xf32>
    %c0_146 = arith.constant 0 : index
    %c0_147 = arith.constant 0 : index
    %316 = vector.load %arg23[%c0_146, %c0_147] : memref<1x128xf32, #tpu.memory_space<vmem>>, vector<1x128xf32>
    %317 = vector.broadcast %316 : vector<1x128xf32> to vector<2x128xf32>
    %318 = arith.addf %315, %317 : vector<2x128xf32>
    %319 = vector.shape_cast %318 : vector<2x128xf32> to vector<1x2x128xf32>
    %c0_148 = arith.constant 0 : index
    %c0_149 = arith.constant 0 : index
    %c0_150 = arith.constant 0 : index
    %320 = vector.load %arg24[%c0_148, %c0_149, %c0_150] : memref<1x2x128xf32, #tpu.memory_space<vmem>>, vector<1x2x128xf32>
    tpu.vector_store %arg24[%c0_148, %c0_149, %c0_150], %319 {strides = array<i32>} : memref<1x2x128xf32, #tpu.memory_space<vmem>>, vector<1x2x128xf32>,
    return
  }
  func.func @transform_0(%arg0: i32) -> (i32, i32, i32) {
    %c0_i32 = arith.constant 0 : i32
    %c0_i32_0 = arith.constant 0 : i32
    %c0_i32_1 = arith.constant 0 : i32
    return %arg0, %c0_i32, %c0_i32_0 : i32, i32, i32
  }
  func.func @transform_1(%arg0: i32) -> (i32, i32, i32) {
    %c0_i32 = arith.constant 0 : i32
    %c0_i32_0 = arith.constant 0 : i32
    %c0_i32_1 = arith.constant 0 : i32
    return %arg0, %c0_i32, %c0_i32_0 : i32, i32, i32
  }
  func.func @transform_2(%arg0: i32) -> (i32, i32) {
    %c0_i32 = arith.constant 0 : i32
    %c0_i32_0 = arith.constant 0 : i32
    %c0_i32_1 = arith.constant 0 : i32
    return %c0_i32, %c0_i32_0 : i32, i32
  }
  func.func @transform_3(%arg0: i32) -> (i32, i32) {
    %c0_i32 = arith.constant 0 : i32
    %c0_i32_0 = arith.constant 0 : i32
    %c0_i32_1 = arith.constant 0 : i32
    return %c0_i32, %c0_i32_0 : i32, i32
  }
  func.func @transform_4(%arg0: i32) -> (i32, i32) {
    %c0_i32 = arith.constant 0 : i32
    %c0_i32_0 = arith.constant 0 : i32
    %c0_i32_1 = arith.constant 0 : i32
    return %c0_i32, %c0_i32_0 : i32, i32
  }
  func.func @transform_5(%arg0: i32) -> (i32, i32) {
    %c0_i32 = arith.constant 0 : i32
    %c0_i32_0 = arith.constant 0 : i32
    %c0_i32_1 = arith.constant 0 : i32
    return %c0_i32, %c0_i32_0 : i32, i32
  }
  func.func @transform_6(%arg0: i32) -> (i32, i32) {
    %c0_i32 = arith.constant 0 : i32
    %c0_i32_0 = arith.constant 0 : i32
    %c0_i32_1 = arith.constant 0 : i32
    return %c0_i32, %c0_i32_0 : i32, i32
  }
  func.func @transform_7(%arg0: i32) -> (i32, i32, i32) {
    %c0_i32 = arith.constant 0 : i32
    %c0_i32_0 = arith.constant 0 : i32
    %c0_i32_1 = arith.constant 0 : i32
    %c0_i32_2 = arith.constant 0 : i32
    return %c0_i32, %c0_i32_0, %c0_i32_1 : i32, i32, i32
  }
  func.func @transform_8(%arg0: i32) -> (i32, i32, i32) {
    %c0_i32 = arith.constant 0 : i32
    %c0_i32_0 = arith.constant 0 : i32
    %c0_i32_1 = arith.constant 0 : i32
    %c0_i32_2 = arith.constant 0 : i32
    return %c0_i32, %c0_i32_0, %c0_i32_1 : i32, i32, i32
  }
  func.func @transform_9(%arg0: i32) -> (i32, i32, i32) {
    %c0_i32 = arith.constant 0 : i32
    %c0_i32_0 = arith.constant 0 : i32
    %c0_i32_1 = arith.constant 0 : i32
    %c0_i32_2 = arith.constant 0 : i32
    return %c0_i32, %c0_i32_0, %c0_i32_1 : i32, i32, i32
  }
  func.func @transform_10(%arg0: i32) -> (i32, i32, i32) {
    %c0_i32 = arith.constant 0 : i32
    %c0_i32_0 = arith.constant 0 : i32
    %c0_i32_1 = arith.constant 0 : i32
    %c0_i32_2 = arith.constant 0 : i32
    return %c0_i32, %c0_i32_0, %c0_i32_1 : i32, i32, i32
  }
  func.func @transform_11(%arg0: i32) -> (i32, i32, i32) {
    %c0_i32 = arith.constant 0 : i32
    %c0_i32_0 = arith.constant 0 : i32
    %c0_i32_1 = arith.constant 0 : i32
    %c0_i32_2 = arith.constant 0 : i32
    return %c0_i32, %c0_i32_0, %c0_i32_1 : i32, i32, i32
  }
  func.func @transform_12(%arg0: i32) -> (i32, i32, i32) {
    %c0_i32 = arith.constant 0 : i32
    %c0_i32_0 = arith.constant 0 : i32
    %c0_i32_1 = arith.constant 0 : i32
    %c0_i32_2 = arith.constant 0 : i32
    return %c0_i32, %c0_i32_0, %c0_i32_1 : i32, i32, i32
  }
  func.func @transform_13(%arg0: i32) -> (i32, i32, i32) {
    %c0_i32 = arith.constant 0 : i32
    %c0_i32_0 = arith.constant 0 : i32
    %c0_i32_1 = arith.constant 0 : i32
    %c0_i32_2 = arith.constant 0 : i32
    return %c0_i32, %c0_i32_0, %c0_i32_1 : i32, i32, i32
  }
  func.func @transform_14(%arg0: i32) -> (i32, i32, i32) {
    %c0_i32 = arith.constant 0 : i32
    %c0_i32_0 = arith.constant 0 : i32
    %c0_i32_1 = arith.constant 0 : i32
    %c0_i32_2 = arith.constant 0 : i32
    return %c0_i32, %c0_i32_0, %c0_i32_1 : i32, i32, i32
  }
  func.func @transform_15(%arg0: i32) -> (i32, i32, i32) {
    %c0_i32 = arith.constant 0 : i32
    %c0_i32_0 = arith.constant 0 : i32
    %c0_i32_1 = arith.constant 0 : i32
    %c0_i32_2 = arith.constant 0 : i32
    return %c0_i32, %c0_i32_0, %c0_i32_1 : i32, i32, i32
  }
  func.func @transform_16(%arg0: i32) -> (i32, i32, i32) {
    %c0_i32 = arith.constant 0 : i32
    %c0_i32_0 = arith.constant 0 : i32
    %c0_i32_1 = arith.constant 0 : i32
    %c0_i32_2 = arith.constant 0 : i32
    return %c0_i32, %c0_i32_0, %c0_i32_1 : i32, i32, i32
  }
  func.func @transform_17(%arg0: i32) -> (i32, i32, i32) {
    %c0_i32 = arith.constant 0 : i32
    %c0_i32_0 = arith.constant 0 : i32
    %c0_i32_1 = arith.constant 0 : i32
    %c0_i32_2 = arith.constant 0 : i32
    return %c0_i32, %c0_i32_0, %c0_i32_1 : i32, i32, i32
  }
  func.func @transform_18(%arg0: i32) -> (i32, i32, i32) {
    %c0_i32 = arith.constant 0 : i32
    %c0_i32_0 = arith.constant 0 : i32
    %c0_i32_1 = arith.constant 0 : i32
    %c0_i32_2 = arith.constant 0 : i32
    return %c0_i32, %c0_i32_0, %c0_i32_1 : i32, i32, i32
  }
  func.func @transform_19(%arg0: i32) -> (i32, i32) {
    %c0_i32 = arith.constant 0 : i32
    %c0_i32_0 = arith.constant 0 : i32
    %c0_i32_1 = arith.constant 0 : i32
    return %c0_i32, %c0_i32_0 : i32, i32
  }
  func.func @transform_20(%arg0: i32) -> (i32, i32) {
    %c0_i32 = arith.constant 0 : i32
    %c0_i32_0 = arith.constant 0 : i32
    %c0_i32_1 = arith.constant 0 : i32
    return %c0_i32, %c0_i32_0 : i32, i32
  }
  func.func @transform_21(%arg0: i32) -> (i32, i32) {
    %c0_i32 = arith.constant 0 : i32
    %c0_i32_0 = arith.constant 0 : i32
    %c0_i32_1 = arith.constant 0 : i32
    return %c0_i32, %c0_i32_0 : i32, i32
  }
  func.func @transform_22(%arg0: i32) -> (i32, i32) {
    %c0_i32 = arith.constant 0 : i32
    %c0_i32_0 = arith.constant 0 : i32
    %c0_i32_1 = arith.constant 0 : i32
    return %c0_i32, %c0_i32_0 : i32, i32
  }
  func.func @transform_23(%arg0: i32) -> (i32, i32, i32) {
    %c0_i32 = arith.constant 0 : i32
    %c0_i32_0 = arith.constant 0 : i32
    %c0_i32_1 = arith.constant 0 : i32
    return %arg0, %c0_i32, %c0_i32_0 : i32, i32, i32
  }
}

</mosaic_0001>

<llo_original>
// kernel: tpu_custom_call.1
$region0: #{tpu_custom_call.1}
  #allocation0 [shape = 'u32[]', space=smem, size = 0x4, offset = 0x4, fixed_abs, tag = 'smem constant byte address 0x4 - core index']
  #allocation1 [shape = 'u32[72,128]{1,0:T(1,128)}', space=vmem, size = 0x9000, scoped, tag = 'internal scratch']
  %s0 = inlined_call_operand.vmem [shape: s32[1,16,1], index: 0, kind: input, shape index: {}]
  %s1 = inlined_call_operand.vmem [shape: s32[1,2,8], index: 1, kind: input, shape index: {}]
  %s2 = inlined_call_operand.vmem [shape: f32[100,32], index: 2, kind: input, shape index: {}]
  %s3 = inlined_call_operand.vmem [shape: f32[64,32], index: 3, kind: input, shape index: {}]
  %s4 = inlined_call_operand.vmem [shape: f32[2,32], index: 4, kind: input, shape index: {}]
  %s5 = inlined_call_operand.vmem [shape: f32[1,32], index: 5, kind: input, shape index: {}]
  %s6 = inlined_call_operand.vmem [shape: f32[1,32], index: 6, kind: input, shape index: {}]
  %s7 = inlined_call_operand.vmem [shape: f32[2,32,96], index: 7, kind: input, shape index: {}]
  %s8 = inlined_call_operand.vmem [shape: f32[2,1,96], index: 8, kind: input, shape index: {}]
  %s9 = inlined_call_operand.vmem [shape: f32[2,32,32], index: 9, kind: input, shape index: {}]
  %s10 = inlined_call_operand.vmem [shape: f32[2,1,32], index: 10, kind: input, shape index: {}]
  %s11 = inlined_call_operand.vmem [shape: f32[2,1,32], index: 11, kind: input, shape index: {}]
  %s12 = inlined_call_operand.vmem [shape: f32[2,1,32], index: 12, kind: input, shape index: {}]
  %s13 = inlined_call_operand.vmem [shape: f32[2,32,128], index: 13, kind: input, shape index: {}]
  %s14 = inlined_call_operand.vmem [shape: f32[2,1,128], index: 14, kind: input, shape index: {}]
  %s15 = inlined_call_operand.vmem [shape: f32[2,128,32], index: 15, kind: input, shape index: {}]
  %s16 = inlined_call_operand.vmem [shape: f32[2,1,32], index: 16, kind: input, shape index: {}]
  %s17 = inlined_call_operand.vmem [shape: f32[2,1,32], index: 17, kind: input, shape index: {}]
  %s18 = inlined_call_operand.vmem [shape: f32[2,1,32], index: 18, kind: input, shape index: {}]
  %s19 = inlined_call_operand.vmem [shape: f32[32,50], index: 19, kind: input, shape index: {}]
  %s20 = inlined_call_operand.vmem [shape: f32[1,50], index: 20, kind: input, shape index: {}]
  %s21 = inlined_call_operand.vmem [shape: f32[50,128], index: 21, kind: input, shape index: {}]
  %s22 = inlined_call_operand.vmem [shape: f32[1,128], index: 22, kind: input, shape index: {}]
  %s23 = inlined_call_operand.hbm [shape: f32[1,2,128], index: 23, kind: output, shape index: {}]
  %s24 = sld [smem:[#allocation0]]
  $region102: #{tpu_custom_call.1} parent=0
    _
  %s26 = ssub.s32 1, %s24
  %s27 = scalar_select 0, %s26, %s24
  $region1: #{tpu_custom_call.1} parent=0
    #allocation2 [shape = 'u8[1024]{0}', space=vmem, size = 0x400, scoped, tag = 'output window, operand 0, single buffered']
    #allocation3 [shape = 's32[1]{0}', space=sflag, size = 0x4, scoped, tag = 'scoped memory for tpu_custom_call.1']
    %28 = vsyncpa [#allocation3], 0
    // Predicated region
    $region2: #{tpu_custom_call.1} parent=1 // pred_check
      _
    $region3: #{tpu_custom_call.1} parent=1 // pred_check_branch
      %30 = sbr.rel (0) target = $region5
    $region4: #{tpu_custom_call.1} parent=1 // pred_region
      _
    $region5: #{tpu_custom_call.1} parent=1 // pred_fallthru
      _
    // Predicated region
    $region6: #{tpu_custom_call.1} parent=1 // pred_check
      _
    $region7: #{tpu_custom_call.1} parent=1 // pred_check_branch
      %32 = sbr.rel (0) target = $region9
    $region8: #{tpu_custom_call.1} parent=1 // pred_region
      _
    $region9: #{tpu_custom_call.1} parent=1 // pred_fallthru
      _
    // Predicated region
    $region10: #{tpu_custom_call.1} parent=1 // pred_check
      _
    $region11: #{tpu_custom_call.1} parent=1 // pred_check_branch
      %34 = sbr.rel (0) target = $region13
    $region12: #{tpu_custom_call.1} parent=1 // pred_region
      _
    $region13: #{tpu_custom_call.1} parent=1 // pred_fallthru
      _
    // Predicated region
    $region14: #{tpu_custom_call.1} parent=1 // pred_check
      _
    $region15: #{tpu_custom_call.1} parent=1 // pred_check_branch
      %36 = sbr.rel (0) target = $region17
    $region16: #{tpu_custom_call.1} parent=1 // pred_region
      _
    $region17: #{tpu_custom_call.1} parent=1 // pred_fallthru
      _
    // Predicated region
    $region18: #{tpu_custom_call.1} parent=1 // pred_check
      _
    $region19: #{tpu_custom_call.1} parent=1 // pred_check_branch
      %38 = sbr.rel (0) target = $region21
    $region20: #{tpu_custom_call.1} parent=1 // pred_region
      _
    $region21: #{tpu_custom_call.1} parent=1 // pred_fallthru
      _
    // Predicated region
    $region22: #{tpu_custom_call.1} parent=1 // pred_check
      _
    $region23: #{tpu_custom_call.1} parent=1 // pred_check_branch
      %40 = sbr.rel (0) target = $region25
    $region24: #{tpu_custom_call.1} parent=1 // pred_region
      _
    $region25: #{tpu_custom_call.1} parent=1 // pred_fallthru
      _
    // Predicated region
    $region26: #{tpu_custom_call.1} parent=1 // pred_check
      _
    $region27: #{tpu_custom_call.1} parent=1 // pred_check_branch
      %42 = sbr.rel (0) target = $region29
    $region28: #{tpu_custom_call.1} parent=1 // pred_region
      _
    $region29: #{tpu_custom_call.1} parent=1 // pred_fallthru
      _
    // Predicated region
    $region30: #{tpu_custom_call.1} parent=1 // pred_check
      _
    $region31: #{tpu_custom_call.1} parent=1 // pred_check_branch
      %44 = sbr.rel (0) target = $region33
    $region32: #{tpu_custom_call.1} parent=1 // pred_region
      _
    $region33: #{tpu_custom_call.1} parent=1 // pred_fallthru
      _
    // Predicated region
    $region34: #{tpu_custom_call.1} parent=1 // pred_check
      _
    $region35: #{tpu_custom_call.1} parent=1 // pred_check_branch
      %46 = sbr.rel (0) target = $region37
    $region36: #{tpu_custom_call.1} parent=1 // pred_region
      _
    $region37: #{tpu_custom_call.1} parent=1 // pred_fallthru
      _
    // Predicated region
    $region38: #{tpu_custom_call.1} parent=1 // pred_check
      _
    $region39: #{tpu_custom_call.1} parent=1 // pred_check_branch
      %48 = sbr.rel (0) target = $region41
    $region40: #{tpu_custom_call.1} parent=1 // pred_region
      _
    $region41: #{tpu_custom_call.1} parent=1 // pred_fallthru
      _
    // Predicated region
    $region42: #{tpu_custom_call.1} parent=1 // pred_check
      _
    $region43: #{tpu_custom_call.1} parent=1 // pred_check_branch
      %50 = sbr.rel (0) target = $region45
    $region44: #{tpu_custom_call.1} parent=1 // pred_region
      _
    $region45: #{tpu_custom_call.1} parent=1 // pred_fallthru
      _
    // Predicated region
    $region46: #{tpu_custom_call.1} parent=1 // pred_check
      _
    $region47: #{tpu_custom_call.1} parent=1 // pred_check_branch
      %52 = sbr.rel (0) target = $region49
    $region48: #{tpu_custom_call.1} parent=1 // pred_region
      _
    $region49: #{tpu_custom_call.1} parent=1 // pred_fallthru
      _
    // Predicated region
    $region50: #{tpu_custom_call.1} parent=1 // pred_check
      _
    $region51: #{tpu_custom_call.1} parent=1 // pred_check_branch
      %54 = sbr.rel (0) target = $region53
    $region52: #{tpu_custom_call.1} parent=1 // pred_region
      _
    $region53: #{tpu_custom_call.1} parent=1 // pred_fallthru
      _
    // Predicated region
    $region54: #{tpu_custom_call.1} parent=1 // pred_check
      _
    $region55: #{tpu_custom_call.1} parent=1 // pred_check_branch
      %56 = sbr.rel (0) target = $region57
    $region56: #{tpu_custom_call.1} parent=1 // pred_region
      _
    $region57: #{tpu_custom_call.1} parent=1 // pred_fallthru
      _
    // Predicated region
    $region58: #{tpu_custom_call.1} parent=1 // pred_check
      _
    $region59: #{tpu_custom_call.1} parent=1 // pred_check_branch
      %58 = sbr.rel (0) target = $region61
    $region60: #{tpu_custom_call.1} parent=1 // pred_region
      _
    $region61: #{tpu_custom_call.1} parent=1 // pred_fallthru
      _
    // Predicated region
    $region62: #{tpu_custom_call.1} parent=1 // pred_check
      _
    $region63: #{tpu_custom_call.1} parent=1 // pred_check_branch
      %60 = sbr.rel (0) target = $region65
    $region64: #{tpu_custom_call.1} parent=1 // pred_region
      _
    $region65: #{tpu_custom_call.1} parent=1 // pred_fallthru
      _
    // Predicated region
    $region66: #{tpu_custom_call.1} parent=1 // pred_check
      _
    $region67: #{tpu_custom_call.1} parent=1 // pred_check_branch
      %62 = sbr.rel (0) target = $region69
    $region68: #{tpu_custom_call.1} parent=1 // pred_region
      _
    $region69: #{tpu_custom_call.1} parent=1 // pred_fallthru
      _
    // Predicated region
    $region70: #{tpu_custom_call.1} parent=1 // pred_check
      _
    $region71: #{tpu_custom_call.1} parent=1 // pred_check_branch
      %64 = sbr.rel (0) target = $region73
    $region72: #{tpu_custom_call.1} parent=1 // pred_region
      _
    $region73: #{tpu_custom_call.1} parent=1 // pred_fallthru
      _
    // Predicated region
    $region74: #{tpu_custom_call.1} parent=1 // pred_check
      _
    $region75: #{tpu_custom_call.1} parent=1 // pred_check_branch
      %66 = sbr.rel (0) target = $region77
    $region76: #{tpu_custom_call.1} parent=1 // pred_region
      _
    $region77: #{tpu_custom_call.1} parent=1 // pred_fallthru
      _
    // Predicated region
    $region78: #{tpu_custom_call.1} parent=1 // pred_check
      _
    $region79: #{tpu_custom_call.1} parent=1 // pred_check_branch
      %68 = sbr.rel (0) target = $region81
    $region80: #{tpu_custom_call.1} parent=1 // pred_region
      _
    $region81: #{tpu_custom_call.1} parent=1 // pred_fallthru
      _
    // Predicated region
    $region82: #{tpu_custom_call.1} parent=1 // pred_check
      _
    $region83: #{tpu_custom_call.1} parent=1 // pred_check_branch
      %70 = sbr.rel (0) target = $region85
    $region84: #{tpu_custom_call.1} parent=1 // pred_region
      _
    $region85: #{tpu_custom_call.1} parent=1 // pred_fallthru
      _
    // Predicated region
    $region86: #{tpu_custom_call.1} parent=1 // pred_check
      _
    $region87: #{tpu_custom_call.1} parent=1 // pred_check_branch
      %72 = sbr.rel (0) target = $region89
    $region88: #{tpu_custom_call.1} parent=1 // pred_region
      _
    $region89: #{tpu_custom_call.1} parent=1 // pred_fallthru
      _
    // Predicated region
    $region90: #{tpu_custom_call.1} parent=1 // pred_check
      _
    $region91: #{tpu_custom_call.1} parent=1 // pred_check_branch
      %74 = sbr.rel (0) target = $region93
    $region92: #{tpu_custom_call.1} parent=1 // pred_region
      _
    $region93: #{tpu_custom_call.1} parent=1 // pred_fallthru
      _
    %v75 = vld [vmem:[%s0] sm:$0xff]
    %v76 = vld [vmem:[%s0 + $0x8] sm:$0xff]
    %v77 = vlaneseq
    %v78 = vand.u32 %v77, 127
    %79 = vset.pattern.permute.xlu0 0
    %80 = vperm.xlu0 %79, %v75
    %v81 = vpop.permute.xlu0 %80
    %82 = vset.pattern.permute.xlu0 0
    %83 = vperm.xlu0 %82, %v76
    %v84 = vpop.permute.xlu0 %83
    %vm85 = vcmp.eq.s32.totalorder %v81, %v78
    %vm86 = vcmp.eq.s32.totalorder %v84, %v78
    %v87 = vsel %vm85, 1, 0
    %v88 = vsel %vm86, 1, 0
    %v89 = vcvt.s32.f32 %v87
    %v90 = vcvt.s32.f32 %v88
    %v91 = vld [vmem:[%s2] sm:$0xff]
    %v92 = vld [vmem:[%s2 + $0x8] sm:$0xff]
    %v93 = vld [vmem:[%s2 + $0x10] sm:$0xff]
    %v94 = vld [vmem:[%s2 + $0x18] sm:$0xff]
    %v95 = vld [vmem:[%s2 + $0x20] sm:$0xff]
    %v96 = vld [vmem:[%s2 + $0x28] sm:$0xff]
    %v97 = vld [vmem:[%s2 + $0x30] sm:$0xff]
    %v98 = vld [vmem:[%s2 + $0x38] sm:$0xff]
    %v99 = vld [vmem:[%s2 + $0x40] sm:$0xff]
    %v100 = vld [vmem:[%s2 + $0x48] sm:$0xff]
    %v101 = vld [vmem:[%s2 + $0x50] sm:$0xff]
    %v102 = vld [vmem:[%s2 + $0x58] sm:$0xff]
    %v103 = vld [vmem:[%s2 + $0x60] sm:$0xf]
    %vm104 = vcmask 818176
    %v106 = vsel %vm104, %v89, 0
    %v109 = vsel %vm104, %v90, 0
    %vm111 = vcmask 1043456
    %v113 = vsel %vm111, %v103, 0
    %115 = vmatpush.msra.mxu0 0.0
    %116 = vmatpush.msra.mxu0 0.0
    %117 = vmatpush.msra.mxu0 0.0
    %118 = vmatpush.msra.mxu0 %v113
    %119 = vmatpush.msra.mxu0 %v102
    %120 = vmatpush.msra.mxu0 %v101
    %121 = vmatpush.msra.mxu0 %v100
    %122 = vmatpush.msra.mxu0 %v99
    %123 = vmatpush.msra.mxu0 %v98
    %124 = vmatpush.msra.mxu0 %v97
    %125 = vmatpush.msra.mxu0 %v96
    %126 = vmatpush.msra.mxu0 %v95
    %127 = vmatpush.msra.mxu0 %v94
    %128 = vmatpush.msra.mxu0 %v93
    %129 = vmatpush.msra.mxu0 %v92
    %130 = vmatpush.msra.mxu0 %v91
    %131 = vmatmul.f32.gmra.mxu0 %v106
    %v132 = vpop.f32.mrf.mxu0
    %v133 = vadd.f32 0.0, %v132
    %134 = vmatmul.f32.gmra.mxu0 %v109
    %v135 = vpop.f32.mrf.mxu0
    %v136 = vadd.f32 0.0, %v135
    %137 = vdwg.mxu0
    %v138 = vld [vmem:[%s3] sm:$0xff]
    %v139 = vadd.f32 %v133, %v138
    %v140 = vadd.f32 %v136, %v138
    %v141 = vld [vmem:[%s4] sm:$0x1]
    %v142 = vperm.slane %v141, 0
    %v143 = vadd.f32 %v139, %v142
    %v144 = vadd.f32 %v140, %v142
    %v145 = vld [vmem:[%s5] sm:$0x1]
    %v146 = vld [vmem:[%s6] sm:$0x1]
    %vm147 = vcmask 261120
    %v148 = vsel %vm147, %v143, 0.0
    %149 = vadd.xlane.f32.xlu0 %v148
    %v150 = vpop.xlane.xlu0 %149
    %v151 = vsel %vm147, %v144, 0.0
    %152 = vadd.xlane.f32.xlu0 %v151
    %v153 = vpop.xlane.xlu0 %152
    %v154 = vrcp.pop 32.0
    %v155 = vmul.f32 32.0, %v154
    %v156 = vsub.f32 1.0, %v155
    %v157 = vmul.f32 %v154, %v156
    %v158 = vadd.f32 %v154, %v157
    %vm159 = vweird.f32 %v154
    %v160 = vsel %vm159, %v154, %v158
    %v161 = vmul.f32 %v150, %v160
    %v162 = vmul.f32 %v153, %v160
    %v163 = vsub.f32 %v143, %v161
    %v164 = vsub.f32 %v144, %v162
    %v165 = vmul.f32 %v163, %v163
    %v166 = vmul.f32 %v164, %v164
    %v167 = vsel %vm147, %v165, 0.0
    %168 = vadd.xlane.f32.xlu0 %v167
    %v169 = vpop.xlane.xlu0 %168
    %v170 = vsel %vm147, %v166, 0.0
    %171 = vadd.xlane.f32.xlu0 %v170
    %v172 = vpop.xlane.xlu0 %171
    %v173 = vmul.f32 %v169, %v160
    %v174 = vmul.f32 %v172, %v160
    %v175 = vadd.f32 %v173, 1e-12
    %v176 = vadd.f32 %v174, 1e-12
    %v177 = vrsqrt.pop %v175
    %v178 = vmul.f32 %v177, %v175
    %v179 = vmul.f32 %v178, %v177
    %v180 = vmul.f32 0.5, %v179
    %v181 = vsub.f32 1.5, %v180
    %v182 = vmul.f32 %v177, %v181
    %vm183 = vweird.f32 %v175
    %vm184 = vweird.f32 %v177
    %vm185 = vmor %vm183, %vm184
    %v186 = vsel %vm185, %v177, %v182
    %v187 = vrsqrt.pop %v176
    %v188 = vmul.f32 %v187, %v176
    %v189 = vmul.f32 %v188, %v187
    %v190 = vmul.f32 0.5, %v189
    %v191 = vsub.f32 1.5, %v190
    %v192 = vmul.f32 %v187, %v191
    %vm193 = vweird.f32 %v176
    %vm194 = vweird.f32 %v187
    %vm195 = vmor %vm193, %vm194
    %v196 = vsel %vm195, %v187, %v192
    %v197 = vmul.f32 %v163, %v186
    %v198 = vmul.f32 %v164, %v196
    %v200 = vperm.slane %v145, 0
    %v202 = vmul.f32 %v197, %v200
    %v203 = vmul.f32 %v198, %v200
    %v205 = vperm.slane %v146, 0
    %v207 = vadd.f32 %v202, %v205
    %v208 = vadd.f32 %v203, %v205
    %v209 = vld [vmem:[%s1] sm:$0x3]
    %v210 = vcvt.s32.f32 %v209
    %v211 = vsub.f32 1.0, %v210
    %v212 = vmul.f32 %v211, -10000.0
    %v214 = vrot.slane %v212, 1
    %v215 = vperm.slane %v212, 0
    %v216 = vperm.slane %v214, 0
    %v219 = vld [vmem:[%s7] sm:$0xff]
    %v220 = vld [vmem:[%s7 + $0x8] sm:$0xff]
    %v221 = vld [vmem:[%s7 + $0x10] sm:$0xff]
    %v222 = vld [vmem:[%s7 + $0x18] sm:$0xff]
    %v223 = vld [vmem:[%s8] sm:$0x1]
    %v225 = vperm.slane %v223, 0
    %v228 = vsel %vm147, %v207, 0
    %v231 = vsel %vm147, %v208, 0
    %233 = vmatpush.msra.mxu0 0.0
    %234 = vmatpush.msra.mxu0 0.0
    %235 = vmatpush.msra.mxu0 0.0
    %236 = vmatpush.msra.mxu0 0.0
    %237 = vmatpush.msra.mxu0 0.0
    %238 = vmatpush.msra.mxu0 0.0
    %239 = vmatpush.msra.mxu0 0.0
    %240 = vmatpush.msra.mxu0 0.0
    %241 = vmatpush.msra.mxu0 0.0
    %242 = vmatpush.msra.mxu0 0.0
    %243 = vmatpush.msra.mxu0 0.0
    %244 = vmatpush.msra.mxu0 0.0
    %245 = vmatpush.msra.mxu0 %v222
    %246 = vmatpush.msra.mxu0 %v221
    %247 = vmatpush.msra.mxu0 %v220
    %248 = vmatpush.msra.mxu0 %v219
    %249 = vmatmul.f32.gmra.mxu0 %v228
    %v250 = vpop.f32.mrf.mxu0
    %v251 = vadd.f32 %v225, %v250
    %252 = vmatmul.f32.gmra.mxu0 %v231
    %v253 = vpop.f32.mrf.mxu0
    %v254 = vadd.f32 %v225, %v253
    %255 = vdwg.mxu0
    %258 = vrot.lane.b32.xlu0 %v251, 112
    %v259 = vpop.permute.xlu0 %258
    %260 = vrot.lane.b32.xlu0 %v254, 112
    %v261 = vpop.permute.xlu0 %260
    %262 = vrot.lane.b32.xlu0 %v251, 96
    %v263 = vpop.permute.xlu0 %262
    %vm264 = vcmask 130048
    %v265 = vsel %vm264, %v251, 0
    %v267 = vsel %vm264, %v263, 0
    %269 = vmatpush.xpose.msra.mxu0 0.0
    %270 = vmatpush.xpose.msra.mxu0 0.0
    %271 = vmatpush.xpose.msra.mxu0 0.0
    %272 = vmatpush.xpose.msra.mxu0 0.0
    %273 = vmatpush.xpose.msra.mxu0 0.0
    %274 = vmatpush.xpose.msra.mxu0 0.0
    %275 = vmatpush.xpose.msra.mxu0 0.0
    %276 = vmatpush.xpose.msra.mxu0 0.0
    %277 = vmatpush.xpose.msra.mxu0 0.0
    %278 = vmatpush.xpose.msra.mxu0 0.0
    %279 = vmatpush.xpose.msra.mxu0 0.0
    %280 = vmatpush.xpose.msra.mxu0 0.0
    %281 = vmatpush.xpose.msra.mxu0 0.0
    %282 = vmatpush.xpose.msra.mxu0 0.0
    %283 = vmatpush.xpose.msra.mxu0 0.0
    %284 = vmatpush.xpose.msra.mxu0 %v267
    %285 = vmatmul.f32.gmra.mxu0 %v265
    %v286 = vpop.f32.mrf.mxu0
    %v287 = vadd.f32 %v215, %v286
    %288 = vdwg.mxu0
    %289 = vrot.lane.b32.xlu0 %v254, 96
    %v290 = vpop.permute.xlu0 %289
    %v291 = vsel %vm264, %v254, 0
    %v293 = vsel %vm264, %v290, 0
    %295 = vmatpush.xpose.msra.mxu0 0.0
    %296 = vmatpush.xpose.msra.mxu0 0.0
    %297 = vmatpush.xpose.msra.mxu0 0.0
    %298 = vmatpush.xpose.msra.mxu0 0.0
    %299 = vmatpush.xpose.msra.mxu0 0.0
    %300 = vmatpush.xpose.msra.mxu0 0.0
    %301 = vmatpush.xpose.msra.mxu0 0.0
    %302 = vmatpush.xpose.msra.mxu0 0.0
    %303 = vmatpush.xpose.msra.mxu0 0.0
    %304 = vmatpush.xpose.msra.mxu0 0.0
    %305 = vmatpush.xpose.msra.mxu0 0.0
    %306 = vmatpush.xpose.msra.mxu0 0.0
    %307 = vmatpush.xpose.msra.mxu0 0.0
    %308 = vmatpush.xpose.msra.mxu0 0.0
    %309 = vmatpush.xpose.msra.mxu0 0.0
    %310 = vmatpush.xpose.msra.mxu0 %v293
    %311 = vmatmul.f32.gmra.mxu0 %v291
    %v312 = vpop.f32.mrf.mxu0
    %v313 = vadd.f32 %v216, %v312
    %314 = vdwg.mxu0
    %315 = vrot.lane.b32.xlu0 %v259, 96
    %v316 = vpop.permute.xlu0 %315
    %v317 = vsel %vm264, %v259, 0
    %v319 = vsel %vm264, %v316, 0
    %321 = vmatpush.xpose.msra.mxu0 0.0
    %322 = vmatpush.xpose.msra.mxu0 0.0
    %323 = vmatpush.xpose.msra.mxu0 0.0
    %324 = vmatpush.xpose.msra.mxu0 0.0
    %325 = vmatpush.xpose.msra.mxu0 0.0
    %326 = vmatpush.xpose.msra.mxu0 0.0
    %327 = vmatpush.xpose.msra.mxu0 0.0
    %328 = vmatpush.xpose.msra.mxu0 0.0
    %329 = vmatpush.xpose.msra.mxu0 0.0
    %330 = vmatpush.xpose.msra.mxu0 0.0
    %331 = vmatpush.xpose.msra.mxu0 0.0
    %332 = vmatpush.xpose.msra.mxu0 0.0
    %333 = vmatpush.xpose.msra.mxu0 0.0
    %334 = vmatpush.xpose.msra.mxu0 0.0
    %335 = vmatpush.xpose.msra.mxu0 0.0
    %336 = vmatpush.xpose.msra.mxu0 %v319
    %337 = vmatmul.f32.gmra.mxu0 %v317
    %v338 = vpop.f32.mrf.mxu0
    %v339 = vadd.f32 %v215, %v338
    %340 = vdwg.mxu0
    %341 = vrot.lane.b32.xlu0 %v261, 96
    %v342 = vpop.permute.xlu0 %341
    %v343 = vsel %vm264, %v261, 0
    %v345 = vsel %vm264, %v342, 0
    %347 = vmatpush.xpose.msra.mxu0 0.0
    %348 = vmatpush.xpose.msra.mxu0 0.0
    %349 = vmatpush.xpose.msra.mxu0 0.0
    %350 = vmatpush.xpose.msra.mxu0 0.0
    %351 = vmatpush.xpose.msra.mxu0 0.0
    %352 = vmatpush.xpose.msra.mxu0 0.0
    %353 = vmatpush.xpose.msra.mxu0 0.0
    %354 = vmatpush.xpose.msra.mxu0 0.0
    %355 = vmatpush.xpose.msra.mxu0 0.0
    %356 = vmatpush.xpose.msra.mxu0 0.0
    %357 = vmatpush.xpose.msra.mxu0 0.0
    %358 = vmatpush.xpose.msra.mxu0 0.0
    %359 = vmatpush.xpose.msra.mxu0 0.0
    %360 = vmatpush.xpose.msra.mxu0 0.0
    %361 = vmatpush.xpose.msra.mxu0 0.0
    %362 = vmatpush.xpose.msra.mxu0 %v345
    %363 = vmatmul.f32.gmra.mxu0 %v343
    %v364 = vpop.f32.mrf.mxu0
    %v365 = vadd.f32 %v216, %v364
    %366 = vdwg.mxu0
    %vm367 = vcmask 64512
    %v368 = vsel %vm367, %v287, -inf
    %369 = vmax.xlane.f32.xlu0 %v368
    %v370 = vpop.xlane.xlu0 %369
    %v371 = vsel %vm367, %v313, -inf
    %372 = vmax.xlane.f32.xlu0 %v371
    %v373 = vpop.xlane.xlu0 %372
    %v374 = vsel %vm367, %v339, -inf
    %375 = vmax.xlane.f32.xlu0 %v374
    %v376 = vpop.xlane.xlu0 %375
    %v377 = vsel %vm367, %v365, -inf
    %378 = vmax.xlane.f32.xlu0 %v377
    %v379 = vpop.xlane.xlu0 %378
    %v380 = vsub.f32 %v287, %v370
    %v381 = vsub.f32 %v313, %v373
    %v382 = vsub.f32 %v339, %v376
    %v383 = vsub.f32 %v365, %v379
    %v384 = vmul.f32 %v380, 1.442695
    %v385 = vpow.pop %v384
    %v386 = vmul.f32 %v381, 1.442695
    %v387 = vpow.pop %v386
    %v388 = vmul.f32 %v382, 1.442695
    %v389 = vpow.pop %v388
    %v390 = vmul.f32 %v383, 1.442695
    %v391 = vpow.pop %v390
    %v392 = vsel %vm367, %v385, 0.0
    %393 = vadd.xlane.f32.xlu0 %v392
    %v394 = vpop.xlane.xlu0 %393
    %v395 = vsel %vm367, %v387, 0.0
    %396 = vadd.xlane.f32.xlu0 %v395
    %v397 = vpop.xlane.xlu0 %396
    %v398 = vsel %vm367, %v389, 0.0
    %399 = vadd.xlane.f32.xlu0 %v398
    %v400 = vpop.xlane.xlu0 %399
    %v401 = vsel %vm367, %v391, 0.0
    %402 = vadd.xlane.f32.xlu0 %v401
    %v403 = vpop.xlane.xlu0 %402
    %v404 = vrcp.pop %v394
    %v405 = vrcp.pop %v397
    %v406 = vrcp.pop %v400
    %v407 = vrcp.pop %v403
    %v408 = vmul.f32 %v385, %v404
    %v409 = vmul.f32 %v387, %v405
    %v410 = vmul.f32 %v389, %v406
    %v411 = vmul.f32 %v391, %v407
    %412 = vrot.lane.b32.xlu0 %v251, 64
    %v413 = vpop.permute.xlu0 %412
    %v416 = vsel %vm367, %v408, 0
    %418 = vmatpush.msra.mxu0 0.0
    %419 = vmatpush.msra.mxu0 0.0
    %420 = vmatpush.msra.mxu0 0.0
    %421 = vmatpush.msra.mxu0 0.0
    %422 = vmatpush.msra.mxu0 0.0
    %423 = vmatpush.msra.mxu0 0.0
    %424 = vmatpush.msra.mxu0 0.0
    %425 = vmatpush.msra.mxu0 0.0
    %426 = vmatpush.msra.mxu0 0.0
    %427 = vmatpush.msra.mxu0 0.0
    %428 = vmatpush.msra.mxu0 0.0
    %429 = vmatpush.msra.mxu0 0.0
    %430 = vmatpush.msra.mxu0 0.0
    %431 = vmatpush.msra.mxu0 0.0
    %432 = vmatpush.msra.mxu0 0.0
    %433 = vmatpush.msra.mxu0 %v413
    %434 = vmatmul.f32.gmra.mxu0 %v416
    %v435 = vpop.f32.mrf.mxu0
    %v436 = vadd.f32 0.0, %v435
    %437 = vdwg.mxu0
    %438 = vrot.lane.b32.xlu0 %v254, 64
    %v439 = vpop.permute.xlu0 %438
    %v442 = vsel %vm367, %v409, 0
    %444 = vmatpush.msra.mxu0 0.0
    %445 = vmatpush.msra.mxu0 0.0
    %446 = vmatpush.msra.mxu0 0.0
    %447 = vmatpush.msra.mxu0 0.0
    %448 = vmatpush.msra.mxu0 0.0
    %449 = vmatpush.msra.mxu0 0.0
    %450 = vmatpush.msra.mxu0 0.0
    %451 = vmatpush.msra.mxu0 0.0
    %452 = vmatpush.msra.mxu0 0.0
    %453 = vmatpush.msra.mxu0 0.0
    %454 = vmatpush.msra.mxu0 0.0
    %455 = vmatpush.msra.mxu0 0.0
    %456 = vmatpush.msra.mxu0 0.0
    %457 = vmatpush.msra.mxu0 0.0
    %458 = vmatpush.msra.mxu0 0.0
    %459 = vmatpush.msra.mxu0 %v439
    %460 = vmatmul.f32.gmra.mxu0 %v442
    %v461 = vpop.f32.mrf.mxu0
    %v462 = vadd.f32 0.0, %v461
    %463 = vdwg.mxu0
    %464 = vrot.lane.b32.xlu0 %v259, 64
    %v465 = vpop.permute.xlu0 %464
    %v468 = vsel %vm367, %v410, 0
    %470 = vmatpush.msra.mxu0 0.0
    %471 = vmatpush.msra.mxu0 0.0
    %472 = vmatpush.msra.mxu0 0.0
    %473 = vmatpush.msra.mxu0 0.0
    %474 = vmatpush.msra.mxu0 0.0
    %475 = vmatpush.msra.mxu0 0.0
    %476 = vmatpush.msra.mxu0 0.0
    %477 = vmatpush.msra.mxu0 0.0
    %478 = vmatpush.msra.mxu0 0.0
    %479 = vmatpush.msra.mxu0 0.0
    %480 = vmatpush.msra.mxu0 0.0
    %481 = vmatpush.msra.mxu0 0.0
    %482 = vmatpush.msra.mxu0 0.0
    %483 = vmatpush.msra.mxu0 0.0
    %484 = vmatpush.msra.mxu0 0.0
    %485 = vmatpush.msra.mxu0 %v465
    %486 = vmatmul.f32.gmra.mxu0 %v468
    %v487 = vpop.f32.mrf.mxu0
    %v488 = vadd.f32 0.0, %v487
    %489 = vdwg.mxu0
    %490 = vrot.lane.b32.xlu0 %v261, 64
    %v491 = vpop.permute.xlu0 %490
    %v494 = vsel %vm367, %v411, 0
    %496 = vmatpush.msra.mxu0 0.0
    %497 = vmatpush.msra.mxu0 0.0
    %498 = vmatpush.msra.mxu0 0.0
    %499 = vmatpush.msra.mxu0 0.0
    %500 = vmatpush.msra.mxu0 0.0
    %501 = vmatpush.msra.mxu0 0.0
    %502 = vmatpush.msra.mxu0 0.0
    %503 = vmatpush.msra.mxu0 0.0
    %504 = vmatpush.msra.mxu0 0.0
    %505 = vmatpush.msra.mxu0 0.0
    %506 = vmatpush.msra.mxu0 0.0
    %507 = vmatpush.msra.mxu0 0.0
    %508 = vmatpush.msra.mxu0 0.0
    %509 = vmatpush.msra.mxu0 0.0
    %510 = vmatpush.msra.mxu0 0.0
    %511 = vmatpush.msra.mxu0 %v491
    %512 = vmatmul.f32.gmra.mxu0 %v494
    %v513 = vpop.f32.mrf.mxu0
    %v514 = vadd.f32 0.0, %v513
    %515 = vdwg.mxu0
    %518 = vrot.lane.b32.xlu0 %v488, 16
    %v519 = vpop.permute.xlu0 %518
    %520 = vrot.lane.b32.xlu0 %v514, 16
    %v521 = vpop.permute.xlu0 %520
    %v524 = vsel %vm264, %v436, %v519
    %v525 = vsel %vm264, %v462, %v521
    %v526 = vld [vmem:[%s9] sm:$0xff]
    %v527 = vld [vmem:[%s9 + $0x8] sm:$0xff]
    %v528 = vld [vmem:[%s9 + $0x10] sm:$0xff]
    %v529 = vld [vmem:[%s9 + $0x18] sm:$0xff]
    %v530 = vld [vmem:[%s10] sm:$0x1]
    %v532 = vperm.slane %v530, 0
    %v535 = vsel %vm147, %v524, 0
    %v538 = vsel %vm147, %v525, 0
    %540 = vmatpush.msra.mxu0 0.0
    %541 = vmatpush.msra.mxu0 0.0
    %542 = vmatpush.msra.mxu0 0.0
    %543 = vmatpush.msra.mxu0 0.0
    %544 = vmatpush.msra.mxu0 0.0
    %545 = vmatpush.msra.mxu0 0.0
    %546 = vmatpush.msra.mxu0 0.0
    %547 = vmatpush.msra.mxu0 0.0
    %548 = vmatpush.msra.mxu0 0.0
    %549 = vmatpush.msra.mxu0 0.0
    %550 = vmatpush.msra.mxu0 0.0
    %551 = vmatpush.msra.mxu0 0.0
    %552 = vmatpush.msra.mxu0 %v529
    %553 = vmatpush.msra.mxu0 %v528
    %554 = vmatpush.msra.mxu0 %v527
    %555 = vmatpush.msra.mxu0 %v526
    %556 = vmatmul.f32.gmra.mxu0 %v535
    %v557 = vpop.f32.mrf.mxu0
    %v558 = vadd.f32 %v532, %v557
    %559 = vmatmul.f32.gmra.mxu0 %v538
    %v560 = vpop.f32.mrf.mxu0
    %v561 = vadd.f32 %v532, %v560
    %562 = vdwg.mxu0
    %v563 = vadd.f32 %v207, %v558
    %v564 = vadd.f32 %v208, %v561
    %v565 = vld [vmem:[%s11] sm:$0x1]
    %v566 = vld [vmem:[%s12] sm:$0x1]
    %v567 = vsel %vm147, %v563, 0.0
    %568 = vadd.xlane.f32.xlu0 %v567
    %v569 = vpop.xlane.xlu0 %568
    %v570 = vsel %vm147, %v564, 0.0
    %571 = vadd.xlane.f32.xlu0 %v570
    %v572 = vpop.xlane.xlu0 %571
    %v573 = vmul.f32 %v569, %v160
    %v574 = vmul.f32 %v572, %v160
    %v575 = vsub.f32 %v563, %v573
    %v576 = vsub.f32 %v564, %v574
    %v577 = vmul.f32 %v575, %v575
    %v578 = vmul.f32 %v576, %v576
    %v579 = vsel %vm147, %v577, 0.0
    %580 = vadd.xlane.f32.xlu0 %v579
    %v581 = vpop.xlane.xlu0 %580
    %v582 = vsel %vm147, %v578, 0.0
    %583 = vadd.xlane.f32.xlu0 %v582
    %v584 = vpop.xlane.xlu0 %583
    %v585 = vmul.f32 %v581, %v160
    %v586 = vmul.f32 %v584, %v160
    %v587 = vadd.f32 %v585, 1e-12
    %v588 = vadd.f32 %v586, 1e-12
    %v589 = vrsqrt.pop %v587
    %v590 = vmul.f32 %v589, %v587
    %v591 = vmul.f32 %v590, %v589
    %v592 = vmul.f32 0.5, %v591
    %v593 = vsub.f32 1.5, %v592
    %v594 = vmul.f32 %v589, %v593
    %vm595 = vweird.f32 %v587
    %vm596 = vweird.f32 %v589
    %vm597 = vmor %vm595, %vm596
    %v598 = vsel %vm597, %v589, %v594
    %v599 = vrsqrt.pop %v588
    %v600 = vmul.f32 %v599, %v588
    %v601 = vmul.f32 %v600, %v599
    %v602 = vmul.f32 0.5, %v601
    %v603 = vsub.f32 1.5, %v602
    %v604 = vmul.f32 %v599, %v603
    %vm605 = vweird.f32 %v588
    %vm606 = vweird.f32 %v599
    %vm607 = vmor %vm605, %vm606
    %v608 = vsel %vm607, %v599, %v604
    %v609 = vmul.f32 %v575, %v598
    %v610 = vmul.f32 %v576, %v608
    %v612 = vperm.slane %v565, 0
    %v614 = vmul.f32 %v609, %v612
    %v615 = vmul.f32 %v610, %v612
    %v617 = vperm.slane %v566, 0
    %v619 = vadd.f32 %v614, %v617
    %v620 = vadd.f32 %v615, %v617
    %v621 = vld [vmem:[%s13] sm:$0xff]
    %v622 = vld [vmem:[%s13 + $0x8] sm:$0xff]
    %v623 = vld [vmem:[%s13 + $0x10] sm:$0xff]
    %v624 = vld [vmem:[%s13 + $0x18] sm:$0xff]
    %v625 = vld [vmem:[%s14] sm:$0x1]
    %v627 = vperm.slane %v625, 0
    %v630 = vsel %vm147, %v619, 0
    %v633 = vsel %vm147, %v620, 0
    %635 = vmatpush.msra.mxu0 0.0
    %636 = vmatpush.msra.mxu0 0.0
    %637 = vmatpush.msra.mxu0 0.0
    %638 = vmatpush.msra.mxu0 0.0
    %639 = vmatpush.msra.mxu0 0.0
    %640 = vmatpush.msra.mxu0 0.0
    %641 = vmatpush.msra.mxu0 0.0
    %642 = vmatpush.msra.mxu0 0.0
    %643 = vmatpush.msra.mxu0 0.0
    %644 = vmatpush.msra.mxu0 0.0
    %645 = vmatpush.msra.mxu0 0.0
    %646 = vmatpush.msra.mxu0 0.0
    %647 = vmatpush.msra.mxu0 %v624
    %648 = vmatpush.msra.mxu0 %v623
    %649 = vmatpush.msra.mxu0 %v622
    %650 = vmatpush.msra.mxu0 %v621
    %651 = vmatmul.f32.gmra.mxu0 %v630
    %v652 = vpop.f32.mrf.mxu0
    %v653 = vadd.f32 %v627, %v652
    %654 = vmatmul.f32.gmra.mxu0 %v633
    %v655 = vpop.f32.mrf.mxu0
    %v656 = vadd.f32 %v627, %v655
    %657 = vdwg.mxu0
    %v658 = vmul.f32 %v653, 0.5
    %v659 = vmul.f32 %v656, 0.5
    %v660 = vmul.f32 %v653, 0.044715
    %v661 = vmul.f32 %v656, 0.044715
    %v662 = vmul.f32 %v660, %v653
    %v663 = vmul.f32 %v661, %v656
    %v664 = vmul.f32 %v662, %v653
    %v665 = vmul.f32 %v663, %v656
    %v666 = vadd.f32 %v653, %v664
    %v667 = vadd.f32 %v656, %v665
    %v668 = vmul.f32 %v666, 0.7978846
    %v669 = vmul.f32 %v667, 0.7978846
    %v670 = vtanh.pop %v668
    %v671 = vtanh.pop %v669
    %v672 = vadd.f32 %v670, 1.0
    %v673 = vadd.f32 %v671, 1.0
    %v674 = vmul.f32 %v658, %v672
    %v675 = vmul.f32 %v659, %v673
    %v676 = vld [vmem:[%s15] sm:$0xff]
    %v677 = vld [vmem:[%s15 + $0x8] sm:$0xff]
    %v678 = vld [vmem:[%s15 + $0x10] sm:$0xff]
    %v679 = vld [vmem:[%s15 + $0x18] sm:$0xff]
    %v680 = vld [vmem:[%s15 + $0x20] sm:$0xff]
    %v681 = vld [vmem:[%s15 + $0x28] sm:$0xff]
    %v682 = vld [vmem:[%s15 + $0x30] sm:$0xff]
    %v683 = vld [vmem:[%s15 + $0x38] sm:$0xff]
    %v684 = vld [vmem:[%s15 + $0x40] sm:$0xff]
    %v685 = vld [vmem:[%s15 + $0x48] sm:$0xff]
    %v686 = vld [vmem:[%s15 + $0x50] sm:$0xff]
    %v687 = vld [vmem:[%s15 + $0x58] sm:$0xff]
    %v688 = vld [vmem:[%s15 + $0x60] sm:$0xff]
    %v689 = vld [vmem:[%s15 + $0x68] sm:$0xff]
    %v690 = vld [vmem:[%s15 + $0x70] sm:$0xff]
    %v691 = vld [vmem:[%s15 + $0x78] sm:$0xff]
    %v692 = vld [vmem:[%s16] sm:$0x1]
    %v694 = vperm.slane %v692, 0
    %696 = vmatpush.msra.mxu0 %v691
    %697 = vmatpush.msra.mxu0 %v690
    %698 = vmatpush.msra.mxu0 %v689
    %699 = vmatpush.msra.mxu0 %v688
    %700 = vmatpush.msra.mxu0 %v687
    %701 = vmatpush.msra.mxu0 %v686
    %702 = vmatpush.msra.mxu0 %v685
    %703 = vmatpush.msra.mxu0 %v684
    %704 = vmatpush.msra.mxu0 %v683
    %705 = vmatpush.msra.mxu0 %v682
    %706 = vmatpush.msra.mxu0 %v681
    %707 = vmatpush.msra.mxu0 %v680
    %708 = vmatpush.msra.mxu0 %v679
    %709 = vmatpush.msra.mxu0 %v678
    %710 = vmatpush.msra.mxu0 %v677
    %711 = vmatpush.msra.mxu0 %v676
    %712 = vmatmul.f32.gmra.mxu0 %v674
    %v713 = vpop.f32.mrf.mxu0
    %v714 = vadd.f32 %v694, %v713
    %715 = vmatmul.f32.gmra.mxu0 %v675
    %v716 = vpop.f32.mrf.mxu0
    %v717 = vadd.f32 %v694, %v716
    %718 = vdwg.mxu0
    %v719 = vadd.f32 %v619, %v714
    %v720 = vadd.f32 %v620, %v717
    %v721 = vld [vmem:[%s17] sm:$0x1]
    %v722 = vld [vmem:[%s18] sm:$0x1]
    %v723 = vsel %vm147, %v719, 0.0
    %724 = vadd.xlane.f32.xlu0 %v723
    %v725 = vpop.xlane.xlu0 %724
    %v726 = vsel %vm147, %v720, 0.0
    %727 = vadd.xlane.f32.xlu0 %v726
    %v728 = vpop.xlane.xlu0 %727
    %v729 = vmul.f32 %v725, %v160
    %v730 = vmul.f32 %v728, %v160
    %v731 = vsub.f32 %v719, %v729
    %v732 = vsub.f32 %v720, %v730
    %v733 = vmul.f32 %v731, %v731
    %v734 = vmul.f32 %v732, %v732
    %v735 = vsel %vm147, %v733, 0.0
    %736 = vadd.xlane.f32.xlu0 %v735
    %v737 = vpop.xlane.xlu0 %736
    %v738 = vsel %vm147, %v734, 0.0
    %739 = vadd.xlane.f32.xlu0 %v738
    %v740 = vpop.xlane.xlu0 %739
    %v741 = vmul.f32 %v737, %v160
    %v742 = vmul.f32 %v740, %v160
    %v743 = vadd.f32 %v741, 1e-12
    %v744 = vadd.f32 %v742, 1e-12
    %v745 = vrsqrt.pop %v743
    %v746 = vmul.f32 %v745, %v743
    %v747 = vmul.f32 %v746, %v745
    %v748 = vmul.f32 0.5, %v747
    %v749 = vsub.f32 1.5, %v748
    %v750 = vmul.f32 %v745, %v749
    %vm751 = vweird.f32 %v743
    %vm752 = vweird.f32 %v745
    %vm753 = vmor %vm751, %vm752
    %v754 = vsel %vm753, %v745, %v750
    %v755 = vrsqrt.pop %v744
    %v756 = vmul.f32 %v755, %v744
    %v757 = vmul.f32 %v756, %v755
    %v758 = vmul.f32 0.5, %v757
    %v759 = vsub.f32 1.5, %v758
    %v760 = vmul.f32 %v755, %v759
    %vm761 = vweird.f32 %v744
    %vm762 = vweird.f32 %v755
    %vm763 = vmor %vm761, %vm762
    %v764 = vsel %vm763, %v755, %v760
    %v765 = vmul.f32 %v731, %v754
    %v766 = vmul.f32 %v732, %v764
    %v768 = vperm.slane %v721, 0
    %v770 = vmul.f32 %v765, %v768
    %v771 = vmul.f32 %v766, %v768
    %v773 = vperm.slane %v722, 0
    %v775 = vadd.f32 %v770, %v773
    %v776 = vadd.f32 %v771, %v773
    %s777 = scalar_lea.vmem %s7, 32
    %v778 = vld [vmem:[%s777] sm:$0xff]
    %v779 = vld [vmem:[%s777 + $0x8] sm:$0xff]
    %v780 = vld [vmem:[%s777 + $0x10] sm:$0xff]
    %v781 = vld [vmem:[%s777 + $0x18] sm:$0xff]
    %s782 = scalar_lea.vmem %s8, 1
    %v783 = vld [vmem:[%s782] sm:$0x1]
    %v785 = vperm.slane %v783, 0
    %v788 = vsel %vm147, %v775, 0
    %v791 = vsel %vm147, %v776, 0
    %793 = vmatpush.msra.mxu0 0.0
    %794 = vmatpush.msra.mxu0 0.0
    %795 = vmatpush.msra.mxu0 0.0
    %796 = vmatpush.msra.mxu0 0.0
    %797 = vmatpush.msra.mxu0 0.0
    %798 = vmatpush.msra.mxu0 0.0
    %799 = vmatpush.msra.mxu0 0.0
    %800 = vmatpush.msra.mxu0 0.0
    %801 = vmatpush.msra.mxu0 0.0
    %802 = vmatpush.msra.mxu0 0.0
    %803 = vmatpush.msra.mxu0 0.0
    %804 = vmatpush.msra.mxu0 0.0
    %805 = vmatpush.msra.mxu0 %v781
    %806 = vmatpush.msra.mxu0 %v780
    %807 = vmatpush.msra.mxu0 %v779
    %808 = vmatpush.msra.mxu0 %v778
    %809 = vmatmul.f32.gmra.mxu0 %v788
    %v810 = vpop.f32.mrf.mxu0
    %v811 = vadd.f32 %v785, %v810
    %812 = vmatmul.f32.gmra.mxu0 %v791
    %v813 = vpop.f32.mrf.mxu0
    %v814 = vadd.f32 %v785, %v813
    %815 = vdwg.mxu0
    %818 = vrot.lane.b32.xlu0 %v811, 112
    %v819 = vpop.permute.xlu0 %818
    %820 = vrot.lane.b32.xlu0 %v814, 112
    %v821 = vpop.permute.xlu0 %820
    %822 = vrot.lane.b32.xlu0 %v811, 96
    %v823 = vpop.permute.xlu0 %822
    %v824 = vsel %vm264, %v811, 0
    %v826 = vsel %vm264, %v823, 0
    %828 = vmatpush.xpose.msra.mxu0 0.0
    %829 = vmatpush.xpose.msra.mxu0 0.0
    %830 = vmatpush.xpose.msra.mxu0 0.0
    %831 = vmatpush.xpose.msra.mxu0 0.0
    %832 = vmatpush.xpose.msra.mxu0 0.0
    %833 = vmatpush.xpose.msra.mxu0 0.0
    %834 = vmatpush.xpose.msra.mxu0 0.0
    %835 = vmatpush.xpose.msra.mxu0 0.0
    %836 = vmatpush.xpose.msra.mxu0 0.0
    %837 = vmatpush.xpose.msra.mxu0 0.0
    %838 = vmatpush.xpose.msra.mxu0 0.0
    %839 = vmatpush.xpose.msra.mxu0 0.0
    %840 = vmatpush.xpose.msra.mxu0 0.0
    %841 = vmatpush.xpose.msra.mxu0 0.0
    %842 = vmatpush.xpose.msra.mxu0 0.0
    %843 = vmatpush.xpose.msra.mxu0 %v826
    %844 = vmatmul.f32.gmra.mxu0 %v824
    %v845 = vpop.f32.mrf.mxu0
    %v846 = vadd.f32 %v215, %v845
    %847 = vdwg.mxu0
    %848 = vrot.lane.b32.xlu0 %v814, 96
    %v849 = vpop.permute.xlu0 %848
    %v850 = vsel %vm264, %v814, 0
    %v852 = vsel %vm264, %v849, 0
    %854 = vmatpush.xpose.msra.mxu0 0.0
    %855 = vmatpush.xpose.msra.mxu0 0.0
    %856 = vmatpush.xpose.msra.mxu0 0.0
    %857 = vmatpush.xpose.msra.mxu0 0.0
    %858 = vmatpush.xpose.msra.mxu0 0.0
    %859 = vmatpush.xpose.msra.mxu0 0.0
    %860 = vmatpush.xpose.msra.mxu0 0.0
    %861 = vmatpush.xpose.msra.mxu0 0.0
    %862 = vmatpush.xpose.msra.mxu0 0.0
    %863 = vmatpush.xpose.msra.mxu0 0.0
    %864 = vmatpush.xpose.msra.mxu0 0.0
    %865 = vmatpush.xpose.msra.mxu0 0.0
    %866 = vmatpush.xpose.msra.mxu0 0.0
    %867 = vmatpush.xpose.msra.mxu0 0.0
    %868 = vmatpush.xpose.msra.mxu0 0.0
    %869 = vmatpush.xpose.msra.mxu0 %v852
    %870 = vmatmul.f32.gmra.mxu0 %v850
    %v871 = vpop.f32.mrf.mxu0
    %v872 = vadd.f32 %v216, %v871
    %873 = vdwg.mxu0
    %874 = vrot.lane.b32.xlu0 %v819, 96
    %v875 = vpop.permute.xlu0 %874
    %v876 = vsel %vm264, %v819, 0
    %v878 = vsel %vm264, %v875, 0
    %880 = vmatpush.xpose.msra.mxu0 0.0
    %881 = vmatpush.xpose.msra.mxu0 0.0
    %882 = vmatpush.xpose.msra.mxu0 0.0
    %883 = vmatpush.xpose.msra.mxu0 0.0
    %884 = vmatpush.xpose.msra.mxu0 0.0
    %885 = vmatpush.xpose.msra.mxu0 0.0
    %886 = vmatpush.xpose.msra.mxu0 0.0
    %887 = vmatpush.xpose.msra.mxu0 0.0
    %888 = vmatpush.xpose.msra.mxu0 0.0
    %889 = vmatpush.xpose.msra.mxu0 0.0
    %890 = vmatpush.xpose.msra.mxu0 0.0
    %891 = vmatpush.xpose.msra.mxu0 0.0
    %892 = vmatpush.xpose.msra.mxu0 0.0
    %893 = vmatpush.xpose.msra.mxu0 0.0
    %894 = vmatpush.xpose.msra.mxu0 0.0
    %895 = vmatpush.xpose.msra.mxu0 %v878
    %896 = vmatmul.f32.gmra.mxu0 %v876
    %v897 = vpop.f32.mrf.mxu0
    %v898 = vadd.f32 %v215, %v897
    %899 = vdwg.mxu0
    %900 = vrot.lane.b32.xlu0 %v821, 96
    %v901 = vpop.permute.xlu0 %900
    %v902 = vsel %vm264, %v821, 0
    %v904 = vsel %vm264, %v901, 0
    %906 = vmatpush.xpose.msra.mxu0 0.0
    %907 = vmatpush.xpose.msra.mxu0 0.0
    %908 = vmatpush.xpose.msra.mxu0 0.0
    %909 = vmatpush.xpose.msra.mxu0 0.0
    %910 = vmatpush.xpose.msra.mxu0 0.0
    %911 = vmatpush.xpose.msra.mxu0 0.0
    %912 = vmatpush.xpose.msra.mxu0 0.0
    %913 = vmatpush.xpose.msra.mxu0 0.0
    %914 = vmatpush.xpose.msra.mxu0 0.0
    %915 = vmatpush.xpose.msra.mxu0 0.0
    %916 = vmatpush.xpose.msra.mxu0 0.0
    %917 = vmatpush.xpose.msra.mxu0 0.0
    %918 = vmatpush.xpose.msra.mxu0 0.0
    %919 = vmatpush.xpose.msra.mxu0 0.0
    %920 = vmatpush.xpose.msra.mxu0 0.0
    %921 = vmatpush.xpose.msra.mxu0 %v904
    %922 = vmatmul.f32.gmra.mxu0 %v902
    %v923 = vpop.f32.mrf.mxu0
    %v924 = vadd.f32 %v216, %v923
    %925 = vdwg.mxu0
    %v926 = vsel %vm367, %v846, -inf
    %927 = vmax.xlane.f32.xlu0 %v926
    %v928 = vpop.xlane.xlu0 %927
    %v929 = vsel %vm367, %v872, -inf
    %930 = vmax.xlane.f32.xlu0 %v929
    %v931 = vpop.xlane.xlu0 %930
    %v932 = vsel %vm367, %v898, -inf
    %933 = vmax.xlane.f32.xlu0 %v932
    %v934 = vpop.xlane.xlu0 %933
    %v935 = vsel %vm367, %v924, -inf
    %936 = vmax.xlane.f32.xlu0 %v935
    %v937 = vpop.xlane.xlu0 %936
    %v938 = vsub.f32 %v846, %v928
    %v939 = vsub.f32 %v872, %v931
    %v940 = vsub.f32 %v898, %v934
    %v941 = vsub.f32 %v924, %v937
    %v942 = vmul.f32 %v938, 1.442695
    %v943 = vpow.pop %v942
    %v944 = vmul.f32 %v939, 1.442695
    %v945 = vpow.pop %v944
    %v946 = vmul.f32 %v940, 1.442695
    %v947 = vpow.pop %v946
    %v948 = vmul.f32 %v941, 1.442695
    %v949 = vpow.pop %v948
    %v950 = vsel %vm367, %v943, 0.0
    %951 = vadd.xlane.f32.xlu0 %v950
    %v952 = vpop.xlane.xlu0 %951
    %v953 = vsel %vm367, %v945, 0.0
    %954 = vadd.xlane.f32.xlu0 %v953
    %v955 = vpop.xlane.xlu0 %954
    %v956 = vsel %vm367, %v947, 0.0
    %957 = vadd.xlane.f32.xlu0 %v956
    %v958 = vpop.xlane.xlu0 %957
    %v959 = vsel %vm367, %v949, 0.0
    %960 = vadd.xlane.f32.xlu0 %v959
    %v961 = vpop.xlane.xlu0 %960
    %v962 = vrcp.pop %v952
    %v963 = vrcp.pop %v955
    %v964 = vrcp.pop %v958
    %v965 = vrcp.pop %v961
    %v966 = vmul.f32 %v943, %v962
    %v967 = vmul.f32 %v945, %v963
    %v968 = vmul.f32 %v947, %v964
    %v969 = vmul.f32 %v949, %v965
    %970 = vrot.lane.b32.xlu0 %v811, 64
    %v971 = vpop.permute.xlu0 %970
    %v974 = vsel %vm367, %v966, 0
    %976 = vmatpush.msra.mxu0 0.0
    %977 = vmatpush.msra.mxu0 0.0
    %978 = vmatpush.msra.mxu0 0.0
    %979 = vmatpush.msra.mxu0 0.0
    %980 = vmatpush.msra.mxu0 0.0
    %981 = vmatpush.msra.mxu0 0.0
    %982 = vmatpush.msra.mxu0 0.0
    %983 = vmatpush.msra.mxu0 0.0
    %984 = vmatpush.msra.mxu0 0.0
    %985 = vmatpush.msra.mxu0 0.0
    %986 = vmatpush.msra.mxu0 0.0
    %987 = vmatpush.msra.mxu0 0.0
    %988 = vmatpush.msra.mxu0 0.0
    %989 = vmatpush.msra.mxu0 0.0
    %990 = vmatpush.msra.mxu0 0.0
    %991 = vmatpush.msra.mxu0 %v971
    %992 = vmatmul.f32.gmra.mxu0 %v974
    %v993 = vpop.f32.mrf.mxu0
    %v994 = vadd.f32 0.0, %v993
    %995 = vdwg.mxu0
    %996 = vrot.lane.b32.xlu0 %v814, 64
    %v997 = vpop.permute.xlu0 %996
    %v1000 = vsel %vm367, %v967, 0
    %1002 = vmatpush.msra.mxu0 0.0
    %1003 = vmatpush.msra.mxu0 0.0
    %1004 = vmatpush.msra.mxu0 0.0
    %1005 = vmatpush.msra.mxu0 0.0
    %1006 = vmatpush.msra.mxu0 0.0
    %1007 = vmatpush.msra.mxu0 0.0
    %1008 = vmatpush.msra.mxu0 0.0
    %1009 = vmatpush.msra.mxu0 0.0
    %1010 = vmatpush.msra.mxu0 0.0
    %1011 = vmatpush.msra.mxu0 0.0
    %1012 = vmatpush.msra.mxu0 0.0
    %1013 = vmatpush.msra.mxu0 0.0
    %1014 = vmatpush.msra.mxu0 0.0
    %1015 = vmatpush.msra.mxu0 0.0
    %1016 = vmatpush.msra.mxu0 0.0
    %1017 = vmatpush.msra.mxu0 %v997
    %1018 = vmatmul.f32.gmra.mxu0 %v1000
    %v1019 = vpop.f32.mrf.mxu0
    %v1020 = vadd.f32 0.0, %v1019
    %1021 = vdwg.mxu0
    %1022 = vrot.lane.b32.xlu0 %v819, 64
    %v1023 = vpop.permute.xlu0 %1022
    %v1026 = vsel %vm367, %v968, 0
    %1028 = vmatpush.msra.mxu0 0.0
    %1029 = vmatpush.msra.mxu0 0.0
    %1030 = vmatpush.msra.mxu0 0.0
    %1031 = vmatpush.msra.mxu0 0.0
    %1032 = vmatpush.msra.mxu0 0.0
    %1033 = vmatpush.msra.mxu0 0.0
    %1034 = vmatpush.msra.mxu0 0.0
    %1035 = vmatpush.msra.mxu0 0.0
    %1036 = vmatpush.msra.mxu0 0.0
    %1037 = vmatpush.msra.mxu0 0.0
    %1038 = vmatpush.msra.mxu0 0.0
    %1039 = vmatpush.msra.mxu0 0.0
    %1040 = vmatpush.msra.mxu0 0.0
    %1041 = vmatpush.msra.mxu0 0.0
    %1042 = vmatpush.msra.mxu0 0.0
    %1043 = vmatpush.msra.mxu0 %v1023
    %1044 = vmatmul.f32.gmra.mxu0 %v1026
    %v1045 = vpop.f32.mrf.mxu0
    %v1046 = vadd.f32 0.0, %v1045
    %1047 = vdwg.mxu0
    %1048 = vrot.lane.b32.xlu0 %v821, 64
    %v1049 = vpop.permute.xlu0 %1048
    %v1052 = vsel %vm367, %v969, 0
    %1054 = vmatpush.msra.mxu0 0.0
    %1055 = vmatpush.msra.mxu0 0.0
    %1056 = vmatpush.msra.mxu0 0.0
    %1057 = vmatpush.msra.mxu0 0.0
    %1058 = vmatpush.msra.mxu0 0.0
    %1059 = vmatpush.msra.mxu0 0.0
    %1060 = vmatpush.msra.mxu0 0.0
    %1061 = vmatpush.msra.mxu0 0.0
    %1062 = vmatpush.msra.mxu0 0.0
    %1063 = vmatpush.msra.mxu0 0.0
    %1064 = vmatpush.msra.mxu0 0.0
    %1065 = vmatpush.msra.mxu0 0.0
    %1066 = vmatpush.msra.mxu0 0.0
    %1067 = vmatpush.msra.mxu0 0.0
    %1068 = vmatpush.msra.mxu0 0.0
    %1069 = vmatpush.msra.mxu0 %v1049
    %1070 = vmatmul.f32.gmra.mxu0 %v1052
    %v1071 = vpop.f32.mrf.mxu0
    %v1072 = vadd.f32 0.0, %v1071
    %1073 = vdwg.mxu0
    %1076 = vrot.lane.b32.xlu0 %v1046, 16
    %v1077 = vpop.permute.xlu0 %1076
    %1078 = vrot.lane.b32.xlu0 %v1072, 16
    %v1079 = vpop.permute.xlu0 %1078
    %v1082 = vsel %vm264, %v994, %v1077
    %v1083 = vsel %vm264, %v1020, %v1079
    %s1084 = scalar_lea.vmem %s9, 32
    %v1085 = vld [vmem:[%s1084] sm:$0xff]
    %v1086 = vld [vmem:[%s1084 + $0x8] sm:$0xff]
    %v1087 = vld [vmem:[%s1084 + $0x10] sm:$0xff]
    %v1088 = vld [vmem:[%s1084 + $0x18] sm:$0xff]
    %s1089 = scalar_lea.vmem %s10, 1
    %v1090 = vld [vmem:[%s1089] sm:$0x1]
    %v1092 = vperm.slane %v1090, 0
    %v1095 = vsel %vm147, %v1082, 0
    %v1098 = vsel %vm147, %v1083, 0
    %1100 = vmatpush.msra.mxu0 0.0
    %1101 = vmatpush.msra.mxu0 0.0
    %1102 = vmatpush.msra.mxu0 0.0
    %1103 = vmatpush.msra.mxu0 0.0
    %1104 = vmatpush.msra.mxu0 0.0
    %1105 = vmatpush.msra.mxu0 0.0
    %1106 = vmatpush.msra.mxu0 0.0
    %1107 = vmatpush.msra.mxu0 0.0
    %1108 = vmatpush.msra.mxu0 0.0
    %1109 = vmatpush.msra.mxu0 0.0
    %1110 = vmatpush.msra.mxu0 0.0
    %1111 = vmatpush.msra.mxu0 0.0
    %1112 = vmatpush.msra.mxu0 %v1088
    %1113 = vmatpush.msra.mxu0 %v1087
    %1114 = vmatpush.msra.mxu0 %v1086
    %1115 = vmatpush.msra.mxu0 %v1085
    %1116 = vmatmul.f32.gmra.mxu0 %v1095
    %v1117 = vpop.f32.mrf.mxu0
    %v1118 = vadd.f32 %v1092, %v1117
    %1119 = vmatmul.f32.gmra.mxu0 %v1098
    %v1120 = vpop.f32.mrf.mxu0
    %v1121 = vadd.f32 %v1092, %v1120
    %1122 = vdwg.mxu0
    %v1123 = vadd.f32 %v775, %v1118
    %v1124 = vadd.f32 %v776, %v1121
    %s1125 = scalar_lea.vmem %s11, 1
    %v1126 = vld [vmem:[%s1125] sm:$0x1]
    %s1127 = scalar_lea.vmem %s12, 1
    %v1128 = vld [vmem:[%s1127] sm:$0x1]
    %v1129 = vsel %vm147, %v1123, 0.0
    %1130 = vadd.xlane.f32.xlu0 %v1129
    %v1131 = vpop.xlane.xlu0 %1130
    %v1132 = vsel %vm147, %v1124, 0.0
    %1133 = vadd.xlane.f32.xlu0 %v1132
    %v1134 = vpop.xlane.xlu0 %1133
    %v1135 = vmul.f32 %v1131, %v160
    %v1136 = vmul.f32 %v1134, %v160
    %v1137 = vsub.f32 %v1123, %v1135
    %v1138 = vsub.f32 %v1124, %v1136
    %v1139 = vmul.f32 %v1137, %v1137
    %v1140 = vmul.f32 %v1138, %v1138
    %v1141 = vsel %vm147, %v1139, 0.0
    %1142 = vadd.xlane.f32.xlu0 %v1141
    %v1143 = vpop.xlane.xlu0 %1142
    %v1144 = vsel %vm147, %v1140, 0.0
    %1145 = vadd.xlane.f32.xlu0 %v1144
    %v1146 = vpop.xlane.xlu0 %1145
    %v1147 = vmul.f32 %v1143, %v160
    %v1148 = vmul.f32 %v1146, %v160
    %v1149 = vadd.f32 %v1147, 1e-12
    %v1150 = vadd.f32 %v1148, 1e-12
    %v1151 = vrsqrt.pop %v1149
    %v1152 = vmul.f32 %v1151, %v1149
    %v1153 = vmul.f32 %v1152, %v1151
    %v1154 = vmul.f32 0.5, %v1153
    %v1155 = vsub.f32 1.5, %v1154
    %v1156 = vmul.f32 %v1151, %v1155
    %vm1157 = vweird.f32 %v1149
    %vm1158 = vweird.f32 %v1151
    %vm1159 = vmor %vm1157, %vm1158
    %v1160 = vsel %vm1159, %v1151, %v1156
    %v1161 = vrsqrt.pop %v1150
    %v1162 = vmul.f32 %v1161, %v1150
    %v1163 = vmul.f32 %v1162, %v1161
    %v1164 = vmul.f32 0.5, %v1163
    %v1165 = vsub.f32 1.5, %v1164
    %v1166 = vmul.f32 %v1161, %v1165
    %vm1167 = vweird.f32 %v1150
    %vm1168 = vweird.f32 %v1161
    %vm1169 = vmor %vm1167, %vm1168
    %v1170 = vsel %vm1169, %v1161, %v1166
    %v1171 = vmul.f32 %v1137, %v1160
    %v1172 = vmul.f32 %v1138, %v1170
    %v1174 = vperm.slane %v1126, 0
    %v1176 = vmul.f32 %v1171, %v1174
    %v1177 = vmul.f32 %v1172, %v1174
    %v1179 = vperm.slane %v1128, 0
    %v1181 = vadd.f32 %v1176, %v1179
    %v1182 = vadd.f32 %v1177, %v1179
    %s1183 = scalar_lea.vmem %s13, 32
    %v1184 = vld [vmem:[%s1183] sm:$0xff]
    %v1185 = vld [vmem:[%s1183 + $0x8] sm:$0xff]
    %v1186 = vld [vmem:[%s1183 + $0x10] sm:$0xff]
    %v1187 = vld [vmem:[%s1183 + $0x18] sm:$0xff]
    %s1188 = scalar_lea.vmem %s14, 1
    %v1189 = vld [vmem:[%s1188] sm:$0x1]
    %v1191 = vperm.slane %v1189, 0
    %v1194 = vsel %vm147, %v1181, 0
    %v1197 = vsel %vm147, %v1182, 0
    %1199 = vmatpush.msra.mxu0 0.0
    %1200 = vmatpush.msra.mxu0 0.0
    %1201 = vmatpush.msra.mxu0 0.0
    %1202 = vmatpush.msra.mxu0 0.0
    %1203 = vmatpush.msra.mxu0 0.0
    %1204 = vmatpush.msra.mxu0 0.0
    %1205 = vmatpush.msra.mxu0 0.0
    %1206 = vmatpush.msra.mxu0 0.0
    %1207 = vmatpush.msra.mxu0 0.0
    %1208 = vmatpush.msra.mxu0 0.0
    %1209 = vmatpush.msra.mxu0 0.0
    %1210 = vmatpush.msra.mxu0 0.0
    %1211 = vmatpush.msra.mxu0 %v1187
    %1212 = vmatpush.msra.mxu0 %v1186
    %1213 = vmatpush.msra.mxu0 %v1185
    %1214 = vmatpush.msra.mxu0 %v1184
    %1215 = vmatmul.f32.gmra.mxu0 %v1194
    %v1216 = vpop.f32.mrf.mxu0
    %v1217 = vadd.f32 %v1191, %v1216
    %1218 = vmatmul.f32.gmra.mxu0 %v1197
    %v1219 = vpop.f32.mrf.mxu0
    %v1220 = vadd.f32 %v1191, %v1219
    %1221 = vdwg.mxu0
    %v1222 = vmul.f32 %v1217, 0.5
    %v1223 = vmul.f32 %v1220, 0.5
    %v1224 = vmul.f32 %v1217, 0.044715
    %v1225 = vmul.f32 %v1220, 0.044715
    %v1226 = vmul.f32 %v1224, %v1217
    %v1227 = vmul.f32 %v1225, %v1220
    %v1228 = vmul.f32 %v1226, %v1217
    %v1229 = vmul.f32 %v1227, %v1220
    %v1230 = vadd.f32 %v1217, %v1228
    %v1231 = vadd.f32 %v1220, %v1229
    %v1232 = vmul.f32 %v1230, 0.7978846
    %v1233 = vmul.f32 %v1231, 0.7978846
    %v1234 = vtanh.pop %v1232
    %v1235 = vtanh.pop %v1233
    %v1236 = vadd.f32 %v1234, 1.0
    %v1237 = vadd.f32 %v1235, 1.0
    %v1238 = vmul.f32 %v1222, %v1236
    %v1239 = vmul.f32 %v1223, %v1237
    %s1240 = scalar_lea.vmem %s15, 128
    %v1241 = vld [vmem:[%s1240] sm:$0xff]
    %v1242 = vld [vmem:[%s1240 + $0x8] sm:$0xff]
    %v1243 = vld [vmem:[%s1240 + $0x10] sm:$0xff]
    %v1244 = vld [vmem:[%s1240 + $0x18] sm:$0xff]
    %v1245 = vld [vmem:[%s1240 + $0x20] sm:$0xff]
    %v1246 = vld [vmem:[%s1240 + $0x28] sm:$0xff]
    %v1247 = vld [vmem:[%s1240 + $0x30] sm:$0xff]
    %v1248 = vld [vmem:[%s1240 + $0x38] sm:$0xff]
    %v1249 = vld [vmem:[%s1240 + $0x40] sm:$0xff]
    %v1250 = vld [vmem:[%s1240 + $0x48] sm:$0xff]
    %v1251 = vld [vmem:[%s1240 + $0x50] sm:$0xff]
    %v1252 = vld [vmem:[%s1240 + $0x58] sm:$0xff]
    %v1253 = vld [vmem:[%s1240 + $0x60] sm:$0xff]
    %v1254 = vld [vmem:[%s1240 + $0x68] sm:$0xff]
    %v1255 = vld [vmem:[%s1240 + $0x70] sm:$0xff]
    %v1256 = vld [vmem:[%s1240 + $0x78] sm:$0xff]
    %s1257 = scalar_lea.vmem %s16, 1
    %v1258 = vld [vmem:[%s1257] sm:$0x1]
    %v1260 = vperm.slane %v1258, 0
    %1262 = vmatpush.msra.mxu0 %v1256
    %1263 = vmatpush.msra.mxu0 %v1255
    %1264 = vmatpush.msra.mxu0 %v1254
    %1265 = vmatpush.msra.mxu0 %v1253
    %1266 = vmatpush.msra.mxu0 %v1252
    %1267 = vmatpush.msra.mxu0 %v1251
    %1268 = vmatpush.msra.mxu0 %v1250
    %1269 = vmatpush.msra.mxu0 %v1249
    %1270 = vmatpush.msra.mxu0 %v1248
    %1271 = vmatpush.msra.mxu0 %v1247
    %1272 = vmatpush.msra.mxu0 %v1246
    %1273 = vmatpush.msra.mxu0 %v1245
    %1274 = vmatpush.msra.mxu0 %v1244
    %1275 = vmatpush.msra.mxu0 %v1243
    %1276 = vmatpush.msra.mxu0 %v1242
    %1277 = vmatpush.msra.mxu0 %v1241
    %1278 = vmatmul.f32.gmra.mxu0 %v1238
    %v1279 = vpop.f32.mrf.mxu0
    %v1280 = vadd.f32 %v1260, %v1279
    %1281 = vmatmul.f32.gmra.mxu0 %v1239
    %v1282 = vpop.f32.mrf.mxu0
    %v1283 = vadd.f32 %v1260, %v1282
    %1284 = vdwg.mxu0
    %v1285 = vadd.f32 %v1181, %v1280
    %v1286 = vadd.f32 %v1182, %v1283
    %s1287 = scalar_lea.vmem %s17, 1
    %v1288 = vld [vmem:[%s1287] sm:$0x1]
    %s1289 = scalar_lea.vmem %s18, 1
    %v1290 = vld [vmem:[%s1289] sm:$0x1]
    %v1291 = vsel %vm147, %v1285, 0.0
    %1292 = vadd.xlane.f32.xlu0 %v1291
    %v1293 = vpop.xlane.xlu0 %1292
    %v1294 = vsel %vm147, %v1286, 0.0
    %1295 = vadd.xlane.f32.xlu0 %v1294
    %v1296 = vpop.xlane.xlu0 %1295
    %v1297 = vmul.f32 %v1293, %v160
    %v1298 = vmul.f32 %v1296, %v160
    %v1299 = vsub.f32 %v1285, %v1297
    %v1300 = vsub.f32 %v1286, %v1298
    %v1301 = vmul.f32 %v1299, %v1299
    %v1302 = vmul.f32 %v1300, %v1300
    %v1303 = vsel %vm147, %v1301, 0.0
    %1304 = vadd.xlane.f32.xlu0 %v1303
    %v1305 = vpop.xlane.xlu0 %1304
    %v1306 = vsel %vm147, %v1302, 0.0
    %1307 = vadd.xlane.f32.xlu0 %v1306
    %v1308 = vpop.xlane.xlu0 %1307
    %v1309 = vmul.f32 %v1305, %v160
    %v1310 = vmul.f32 %v1308, %v160
    %v1311 = vadd.f32 %v1309, 1e-12
    %v1312 = vadd.f32 %v1310, 1e-12
    %v1313 = vrsqrt.pop %v1311
    %v1314 = vmul.f32 %v1313, %v1311
    %v1315 = vmul.f32 %v1314, %v1313
    %v1316 = vmul.f32 0.5, %v1315
    %v1317 = vsub.f32 1.5, %v1316
    %v1318 = vmul.f32 %v1313, %v1317
    %vm1319 = vweird.f32 %v1311
    %vm1320 = vweird.f32 %v1313
    %vm1321 = vmor %vm1319, %vm1320
    %v1322 = vsel %vm1321, %v1313, %v1318
    %v1323 = vrsqrt.pop %v1312
    %v1324 = vmul.f32 %v1323, %v1312
    %v1325 = vmul.f32 %v1324, %v1323
    %v1326 = vmul.f32 0.5, %v1325
    %v1327 = vsub.f32 1.5, %v1326
    %v1328 = vmul.f32 %v1323, %v1327
    %vm1329 = vweird.f32 %v1312
    %vm1330 = vweird.f32 %v1323
    %vm1331 = vmor %vm1329, %vm1330
    %v1332 = vsel %vm1331, %v1323, %v1328
    %v1333 = vmul.f32 %v1299, %v1322
    %v1334 = vmul.f32 %v1300, %v1332
    %v1336 = vperm.slane %v1288, 0
    %v1338 = vmul.f32 %v1333, %v1336
    %v1339 = vmul.f32 %v1334, %v1336
    %v1341 = vperm.slane %v1290, 0
    %v1343 = vadd.f32 %v1338, %v1341
    %v1344 = vadd.f32 %v1339, %v1341
    %v1345 = vld [vmem:[%s19] sm:$0xff]
    %v1346 = vld [vmem:[%s19 + $0x8] sm:$0xff]
    %v1347 = vld [vmem:[%s19 + $0x10] sm:$0xff]
    %v1348 = vld [vmem:[%s19 + $0x18] sm:$0xff]
    %v1349 = vld [vmem:[%s20] sm:$0x1]
    %v1351 = vperm.slane %v1349, 0
    %v1355 = vrot.slane %v1344, 7
    %vm1356 = vcmask 1041409
    %v1357 = vsel %vm1356, %v1355, %v1343
    %v1358 = vsel %vm147, %v1357, 0
    %1360 = vmatpush.msra.mxu0 0.0
    %1361 = vmatpush.msra.mxu0 0.0
    %1362 = vmatpush.msra.mxu0 0.0
    %1363 = vmatpush.msra.mxu0 0.0
    %1364 = vmatpush.msra.mxu0 0.0
    %1365 = vmatpush.msra.mxu0 0.0
    %1366 = vmatpush.msra.mxu0 0.0
    %1367 = vmatpush.msra.mxu0 0.0
    %1368 = vmatpush.msra.mxu0 0.0
    %1369 = vmatpush.msra.mxu0 0.0
    %1370 = vmatpush.msra.mxu0 0.0
    %1371 = vmatpush.msra.mxu0 0.0
    %1372 = vmatpush.msra.mxu0 %v1348
    %1373 = vmatpush.msra.mxu0 %v1347
    %1374 = vmatpush.msra.mxu0 %v1346
    %1375 = vmatpush.msra.mxu0 %v1345
    %1376 = vmatmul.f32.gmra.mxu0 %v1358
    %v1377 = vpop.f32.mrf.mxu0
    %v1378 = vadd.f32 %v1351, %v1377
    %1379 = vdwg.mxu0
    %v1380 = vmax.f32 %v1378, 0.0
    %v1381 = vld [vmem:[%s21] sm:$0xff]
    %v1382 = vld [vmem:[%s21 + $0x8] sm:$0xff]
    %v1383 = vld [vmem:[%s21 + $0x10] sm:$0xff]
    %v1384 = vld [vmem:[%s21 + $0x18] sm:$0xff]
    %v1385 = vld [vmem:[%s21 + $0x20] sm:$0xff]
    %v1386 = vld [vmem:[%s21 + $0x28] sm:$0xff]
    %v1387 = vld [vmem:[%s21 + $0x30] sm:$0x3]
    %v1388 = vld [vmem:[%s22] sm:$0x1]
    %v1390 = vperm.slane %v1388, 0
    %vm1392 = vcmask 408576
    %v1394 = vsel %vm1392, %v1380, 0
    %vm1396 = vcmask 1041408
    %v1398 = vsel %vm1396, %v1387, 0
    %1400 = vmatpush.msra.mxu0 0.0
    %1401 = vmatpush.msra.mxu0 0.0
    %1402 = vmatpush.msra.mxu0 0.0
    %1403 = vmatpush.msra.mxu0 0.0
    %1404 = vmatpush.msra.mxu0 0.0
    %1405 = vmatpush.msra.mxu0 0.0
    %1406 = vmatpush.msra.mxu0 0.0
    %1407 = vmatpush.msra.mxu0 0.0
    %1408 = vmatpush.msra.mxu0 0.0
    %1409 = vmatpush.msra.mxu0 %v1398
    %1410 = vmatpush.msra.mxu0 %v1386
    %1411 = vmatpush.msra.mxu0 %v1385
    %1412 = vmatpush.msra.mxu0 %v1384
    %1413 = vmatpush.msra.mxu0 %v1383
    %1414 = vmatpush.msra.mxu0 %v1382
    %1415 = vmatpush.msra.mxu0 %v1381
    %1416 = vmatmul.f32.gmra.mxu0 %v1394
    %v1417 = vpop.f32.mrf.mxu0
    %v1418 = vadd.f32 %v1390, %v1417
    %1419 = vdwg.mxu0
    %1420 = vst [vmem:[#allocation2] sm:$0x3] %v1418
    // Predicated region
    $region94: #{tpu_custom_call.1} parent=1 // pred_check
      _
    $region95: #{tpu_custom_call.1} parent=1 // pred_check_branch
      %1422 = sbr.rel (0) target = $region97
    $region96: #{tpu_custom_call.1} parent=1 // pred_region
      %1424 = vsyncadd [#allocation3], 0
      %s1426 = sshll.u32 [#allocation2], 4
      %s1427 = int_to_ptr.vmem [resolvable:$true] %s1426
      %s1428 = sshll.u32 %s23, 4
      %s1429 = int_to_ptr.hbm [resolvable:$true] %s1428
      %1431 = dma.vmem_to_hbm [thread:$0]  %s1427, 32, %s1429, [#allocation3]
    $region97: #{tpu_custom_call.1} parent=1 // pred_fallthru
      _
    // Predicated region
    $region98: #{tpu_custom_call.1} parent=1 // pred_check
      _
    $region99: #{tpu_custom_call.1} parent=1 // pred_check_branch
      %1433 = sbr.rel (0) target = $region101
    $region100: #{tpu_custom_call.1} parent=1 // pred_region
      %1435 = dma.done [#allocation3], 32
    $region101: #{tpu_custom_call.1} parent=1 // pred_fallthru
      _
    %1436 = vsyncpa [#allocation3], 1

</llo_original>
